<compile_context>
chip_gen: v6e
topology: v6e:2x2x1
jax: 0.10.0
libtpu: 0.0.40
codegen_flags: <defaults>
</compile_context>

<pallas_src>
import functools

import jax
import jax.numpy as jnp
from jax import lax
from jax.experimental import pallas as pl
from jax.experimental.pallas import tpu as pltpu


# ----------------------------------------------------------------------------
# Fused kernel: Bt batch elements per grid step.
# ----------------------------------------------------------------------------
def _fused_regnet_kernel(s2_ref, s3_ref, mask_ref, rc_ref, qi_ref, qj_ref,
                         wd_ref, bd_ref, wf_ref, bf_ref, out_ref,
                         *, H, W, Bt, neg_slope):
    # s2_ref / s3_ref : (Bt, C, HW) f32   channels on sublanes, HW on lanes
    # mask_ref        : (9, HW)  f32      zero-padding masks per 3x3 tap (hoisted)
    # rc_ref          : (2, HW)  f32      dest-pixel row / col as floats (hoisted)
    # qi_ref / qj_ref : (HW, HW) f32      source-pixel row / col planes (hoisted)
    # wd_ref          : (2F, 9*2C) bf16   block-diagonal dual-encoder weight
    # bd_ref          : (2F, 1)  f32
    # wf_ref          : (2, 9*2F) bf16    flow conv weight
    # bf_ref          : (2, 1)   f32
    # out_ref         : (Bt, C+2, HW) f32 rows 0..C-1 = registered, C..C+1 = flow
    HW = H * W

    mask = mask_ref[...]
    rc = rc_ref[...]
    qi = qi_ref[...]
    qj = qj_ref[...]
    wd = wd_ref[...]
    bd = bd_ref[...]
    wf = wf_ref[...]
    bf = bf_ref[...]

    # 9 lane shifts implementing a 3x3 'same' conv with zero padding on the
    # flattened H*W lane axis; the hoisted mask rows kill the row/col
    # wrap-around of the flattened roll (== zero padding).
    taps = []
    k = 0
    for dy in (-1, 0, 1):
        for dx in (-1, 0, 1):
            taps.append((dy * W + dx, k))
            k += 1

    def im2col(x):
        # x (Cin, HW) f32 -> (9*Cin, HW) bf16; rolls on XLU, masks in f32 VPU,
        # single cast at the end so only MXU operands are bf16.
        cols = []
        for s, kk in taps:
            sh = x if s == 0 else pltpu.roll(x, (-s) % HW, axis=1)
            if s != 0:
                sh = sh * mask[kk:kk + 1, :]
            cols.append(sh)
        return jnp.concatenate(cols, axis=0).astype(jnp.bfloat16)

    for bi in range(Bt):
        s2 = s2_ref[bi]                                       # (C, HW)
        s3 = s3_ref[bi]                                       # (C, HW)

        # Fused dual encoder: ONE matmul with a block-diagonal weight produces
        # unet = [f2; f3] directly (MinNEDualUNet stand-in, see TODO below).
        x = jnp.concatenate([s2, s3], axis=0)                 # (2C, HW)
        unet = jnp.dot(wd, im2col(x),
                       preferred_element_type=jnp.float32) + bd
        unet = jnp.where(unet >= 0, unet, neg_slope * unet)   # LeakyReLU(0.2)

        # Flow conv (weights ~ N(0, 1e-5), bias 0; no activation).
        flow = jnp.dot(wf, im2col(unet),
                       preferred_element_type=jnp.float32) + bf   # (2, HW)

        # ---- SpatialTransformer: bilinear warp, pixel-space flow,
        # ---- padding_mode='zeros'.  Warp weights built directly in
        # ---- (source q on sublanes, dest p on lanes) layout via the
        # ---- separable tent kernel max(0, 1 - |q - sample|); out-of-range
        # ---- samples naturally get zero weight.  One (C,HW)@(HW,HW) matmul.
        y = rc[0:1, :] + flow[0:1, :]                         # (1, HW) sample rows
        xc = rc[1:2, :] + flow[1:2, :]                        # (1, HW) sample cols
        wrow = jnp.maximum(1.0 - jnp.abs(qi - y), 0.0)        # (HW, HW)
        wcol = jnp.maximum(1.0 - jnp.abs(qj - xc), 0.0)       # (HW, HW)
        wfull = (wrow * wcol).astype(jnp.bfloat16)            # (HW, HW)
        reg = jnp.dot(s3.astype(jnp.bfloat16), wfull,
                      preferred_element_type=jnp.float32)     # (C, HW)

        # Single lane-dense store: registered rows then flow rows.
        out_ref[bi] = jnp.concatenate([reg, flow], axis=0).astype(out_ref.dtype)


# ----------------------------------------------------------------------------
# Weight packing helpers.
# ----------------------------------------------------------------------------
def _pack_conv_weight(w_oihw):
    """(Cout, Cin, 3, 3) -> (Cout, 9*Cin), k=(ky*3+kx) major, ci minor."""
    cout, cin = w_oihw.shape[0], w_oihw.shape[1]
    return jnp.transpose(w_oihw, (0, 2, 3, 1)).reshape(cout, 9 * cin).astype(jnp.float32)


def _pack_dual_weight(w2, w3):
    """Two (F, C, 3, 3) encoder weights -> block-diagonal (2F, 9*2C)."""
    zero = jnp.zeros_like(w2)
    top = jnp.concatenate([w2, zero], axis=1)     # f2 rows: only s2 channels
    bot = jnp.concatenate([zero, w3], axis=1)     # f3 rows: only s3 channels
    return _pack_conv_weight(jnp.concatenate([top, bot], axis=0))


def _choose_bt(N):
    """Batch elements per grid step: amortize per-step overhead for large N,
    but keep >= 2 grid steps so both v7x TensorCores get work."""
    if N <= 2:
        return 1
    cap = min(4, N // 2)
    for bt in range(cap, 0, -1):
        if N % bt == 0:
            return bt
    return 1


# ----------------------------------------------------------------------------
# MinNESRegNet
# ----------------------------------------------------------------------------
class MinNESRegNetPallas:
    FEAT = 8

    def __init__(self, input_size, key, flow_std=1e-5):
        C, H, W = input_size
        self.C, self.H, self.W = C, H, W
        HW = H * W
        k1, k2, k3 = jax.random.split(key, 3)
        feat = self.FEAT

        # TODO(synk): MinNEDualUNet source was not provided; using a minimal
        # dual encoder (one 3x3 conv + LeakyReLU(0.2) per input, concat -> 16
        # channels) that satisfies the 16-channel contract required by flow.
        self.w_s2 = jax.random.normal(k1, (feat, C, 3, 3), jnp.float32) * 0.1
        self.b_s2 = jnp.zeros((feat,), jnp.float32)
        self.w_s3 = jax.random.normal(k2, (feat, C, 3, 3), jnp.float32) * 0.1
        self.b_s3 = jnp.zeros((feat,), jnp.float32)
        # flow conv: weights ~ Normal(0, flow_std), bias = 0 (PyTorch spec).
        self.w_flow = jax.random.normal(k3, (2, 2 * feat, 3, 3), jnp.float32) * flow_std
        self.b_flow = jnp.zeros((2,), jnp.float32)

        # Packed MXU operands (bf16 weights, f32 biases).
        self._wd = _pack_dual_weight(self.w_s2, self.w_s3).astype(jnp.bfloat16)
        self._bd = jnp.concatenate([self.b_s2, self.b_s3]).reshape(2 * feat, 1)
        self._wf = _pack_conv_weight(self.w_flow).astype(jnp.bfloat16)
        self._bf = self.b_flow.reshape(2, 1)

        # Grid-invariant constants, hoisted out of the kernel body.
        p = jnp.arange(HW, dtype=jnp.int32)
        prow, pcol = p // W, p % W
        masks = []
        for dy in (-1, 0, 1):
            for dx in (-1, 0, 1):
                if dy == 0 and dx == 0:
                    masks.append(jnp.ones((HW,), jnp.float32))
                else:
                    valid = ((prow + dy >= 0) & (prow + dy < H) &
                             (pcol + dx >= 0) & (pcol + dx < W))
                    masks.append(valid.astype(jnp.float32))
        self._mask = jnp.stack(masks, axis=0)                              # (9, HW)
        self._rc = jnp.stack([prow, pcol], axis=0).astype(jnp.float32)     # (2, HW)
        qi = prow.astype(jnp.float32)[:, None]
        qj = pcol.astype(jnp.float32)[:, None]
        self._qi = jnp.broadcast_to(qi, (HW, HW)) + jnp.zeros((HW, HW), jnp.float32)
        self._qj = jnp.broadcast_to(qj, (HW, HW)) + jnp.zeros((HW, HW), jnp.float32)

    def __call__(self, s2, s3):
        # s2, s3: (N, C, H, W) NCHW, like PyTorch.
        N, C, H, W = s3.shape
        assert (C, H, W) == (self.C, self.H, self.W)
        HW = H * W
        feat = self.FEAT
        bt = _choose_bt(N)

        # NCHW is already channels-major; flattening (H, W) is a free reshape.
        s2_f = s2.reshape(N, C, HW).astype(jnp.float32)
        s3_f = s3.reshape(N, C, HW).astype(jnp.float32)

        kernel = functools.partial(_fused_regnet_kernel, H=H, W=W, Bt=bt,
                                   neg_slope=0.2)
        out = pl.pallas_call(
            kernel,
            out_shape=jax.ShapeDtypeStruct((N, C + 2, HW), jnp.float32),
            grid_spec=pltpu.PrefetchScalarGridSpec(
                num_scalar_prefetch=0,
                grid=(N // bt,),
                in_specs=[
                    pl.BlockSpec((bt, C, HW), lambda n: (n, 0, 0)),
                    pl.BlockSpec((bt, C, HW), lambda n: (n, 0, 0)),
                    pl.BlockSpec((9, HW), lambda n: (0, 0)),
                    pl.BlockSpec((2, HW), lambda n: (0, 0)),
                    pl.BlockSpec((HW, HW), lambda n: (0, 0)),
                    pl.BlockSpec((HW, HW), lambda n: (0, 0)),
                    pl.BlockSpec((2 * feat, 9 * 2 * C), lambda n: (0, 0)),
                    pl.BlockSpec((2 * feat, 1), lambda n: (0, 0)),
                    pl.BlockSpec((2, 9 * 2 * feat), lambda n: (0, 0)),
                    pl.BlockSpec((2, 1), lambda n: (0, 0)),
                ],
                out_specs=pl.BlockSpec((bt, C + 2, HW), lambda n: (n, 0, 0)),
            ),
            compiler_params=pltpu.CompilerParams(
                dimension_semantics=("parallel",)),
        )(s2_f, s3_f, self._mask, self._rc, self._qi, self._qj,
          self._wd, self._bd, self._wf, self._bf)

        registered = out[:, :C, :].reshape(N, C, H, W)
        flow = out[:, C:, :].reshape(N, 2, H, W)
        return registered, flow


# ----------------------------------------------------------------------------
# Pure-JAX references (for correctness checking only).
# ----------------------------------------------------------------------------
def _ref_conv3x3(x_nhwc, w_oihw, b, negative_slope=None):
    w_hwio = jnp.transpose(w_oihw, (2, 3, 1, 0))
    y = lax.conv_general_dilated(x_nhwc, w_hwio, (1, 1), "SAME",
                                 dimension_numbers=("NHWC", "HWIO", "NHWC"))
    y = y + b.reshape(1, 1, 1, -1)
    if negative_slope is not None:
        y = jnp.where(y >= 0, y, negative_slope * y)
    return y


def _ref_grid_sample(src_nchw, flow_nchw):
    # bilinear, pixel-space flow, padding_mode='zeros'
    N, C, H, W = src_nchw.shape
    rows = jnp.broadcast_to(jnp.arange(H, dtype=jnp.float32)[:, None], (H, W))
    cols = jnp.broadcast_to(jnp.arange(W, dtype=jnp.float32)[None, :], (H, W))
    y = rows[None] + flow_nchw[:, 0]
    x = cols[None] + flow_nchw[:, 1]
    y0 = jnp.floor(y); x0 = jnp.floor(x)
    fy = y - y0; fx = x - x0
    y0i = y0.astype(jnp.int32); x0i = x0.astype(jnp.int32)
    y1i = y0i + 1; x1i = x0i + 1

    def gather(src, yi, xi):
        inb = ((yi >= 0) & (yi < H) & (xi >= 0) & (xi < W)).astype(jnp.float32)
        yc = jnp.clip(yi, 0, H - 1)
        xc = jnp.clip(xi, 0, W - 1)
        return src[:, yc, xc] * inb[None]

    def per_batch(src, y0i, y1i, x0i, x1i, fy, fx):
        v00 = gather(src, y0i, x0i)
        v01 = gather(src, y0i, x1i)
        v10 = gather(src, y1i, x0i)
        v11 = gather(src, y1i, x1i)
        return (v00 * ((1 - fy) * (1 - fx))[None] + v01 * ((1 - fy) * fx)[None]
                + v10 * (fy * (1 - fx))[None] + v11 * (fy * fx)[None])

    return jax.vmap(per_batch)(src_nchw, y0i, y1i, x0i, x1i, fy, fx)


def _reference_forward(model, s2, s3):
    s2_nhwc = jnp.transpose(s2, (0, 2, 3, 1))
    s3_nhwc = jnp.transpose(s3, (0, 2, 3, 1))
    f2 = _ref_conv3x3(s2_nhwc, model.w_s2, model.b_s2, 0.2)
    f3 = _ref_conv3x3(s3_nhwc, model.w_s3, model.b_s3, 0.2)
    unet = jnp.concatenate([f2, f3], axis=-1)
    flow_nhwc = _ref_conv3x3(unet, model.w_flow, model.b_flow, None)
    flow_nchw = jnp.transpose(flow_nhwc, (0, 3, 1, 2))
    reg = _ref_grid_sample(s3, flow_nchw)
    return reg, flow_nchw


if __name__ == "__main__":
    key = jax.random.PRNGKey(0)
    k_s2, k_s3, k_param = jax.random.split(key, 3)

    N, C, H, W = 2, 4, 16, 16          # input_size = (C, H, W) of s3
    s2 = jax.random.normal(k_s2, (N, C, H, W), jnp.float32)
    s3 = jax.random.normal(k_s3, (N, C, H, W), jnp.float32)

    model = MinNESRegNetPallas((C, H, W), k_param)
    registered, flow_field = model(s2, s3)
    registered = jax.block_until_ready(registered)
    flow_field = jax.block_until_ready(flow_field)

    assert registered.shape == (N, C, H, W)
    assert flow_field.shape == (N, 2, H, W)

    # Correctness vs pure-JAX reference (tiny flow, as in the PyTorch init).
    ref_reg, ref_flow = _reference_forward(model, s2, s3)
    err_flow = float(jnp.max(jnp.abs(flow_field - ref_flow)))
    err_reg = float(jnp.max(jnp.abs(registered - ref_reg)))
    assert err_flow < 1e-3, f"flow mismatch {err_flow}"
    assert err_reg < 5e-2, f"registered mismatch {err_reg}"

    # Exercise the warp path with a non-trivial (multi-pixel) flow by using a
    # model whose flow conv has larger weights.
    model_big = MinNESRegNetPallas((C, H, W), jax.random.PRNGKey(7), flow_std=0.3)
    reg_b, flow_b = model_big(s2, s3)
    reg_b = jax.block_until_ready(reg_b)
    flow_b = jax.block_until_ready(flow_b)
    ref_flow_b = _reference_forward(model_big, s2, s3)[1]
    err_flow_b = float(jnp.max(jnp.abs(flow_b - ref_flow_b)))
    assert err_flow_b < 0.25, f"big-flow flow mismatch {err_flow_b}"
    # Isolate the STN: warp reference uses the kernel's own flow field.
    err_warp = float(jnp.max(jnp.abs(reg_b - _ref_grid_sample(s3, flow_b))))
    assert err_warp < 5e-2, f"warp mismatch {err_warp}"

    print("KERNEL_OK")
</pallas_src>

<mosaic_0001>
module attributes {stable_mosaic.version = 11 : i64} {
  func.func @_fused_regnet_kernel(%arg0: i32, %arg1: memref<1x4x256xf32, #tpu.memory_space<vmem>>, %arg2: memref<1x4x256xf32, #tpu.memory_space<vmem>>, %arg3: memref<9x256xf32, #tpu.memory_space<vmem>>, %arg4: memref<2x256xf32, #tpu.memory_space<vmem>>, %arg5: memref<256x256xf32, #tpu.memory_space<vmem>>, %arg6: memref<256x256xf32, #tpu.memory_space<vmem>>, %arg7: memref<16x72xbf16, #tpu.memory_space<vmem>>, %arg8: memref<16x1xf32, #tpu.memory_space<vmem>>, %arg9: memref<2x144xbf16, #tpu.memory_space<vmem>>, %arg10: memref<2x1xf32, #tpu.memory_space<vmem>>, %arg11: memref<1x6x256xf32, #tpu.memory_space<vmem>>) attributes {dimension_semantics = [#tpu.dimension_semantics<parallel>], iteration_bounds = array<i64: 2>, scalar_prefetch = 0 : i64, scratch_operands = 0 : i64, tpu.core_type = #tpu.core_type<tc>, window_params = [{transform_indices = @transform_0, window_bounds = array<i64: 1, 4, 256>}, {transform_indices = @transform_1, window_bounds = array<i64: 1, 4, 256>}, {pipeline_mode = #tpu.pipeline_mode<synchronous>, transform_indices = @transform_2, window_bounds = array<i64: 9, 256>}, {pipeline_mode = #tpu.pipeline_mode<synchronous>, transform_indices = @transform_3, window_bounds = array<i64: 2, 256>}, {pipeline_mode = #tpu.pipeline_mode<synchronous>, transform_indices = @transform_4, window_bounds = array<i64: 256, 256>}, {pipeline_mode = #tpu.pipeline_mode<synchronous>, transform_indices = @transform_5, window_bounds = array<i64: 256, 256>}, {pipeline_mode = #tpu.pipeline_mode<synchronous>, transform_indices = @transform_6, window_bounds = array<i64: 16, 72>}, {pipeline_mode = #tpu.pipeline_mode<synchronous>, transform_indices = @transform_7, window_bounds = array<i64: 16, 1>}, {pipeline_mode = #tpu.pipeline_mode<synchronous>, transform_indices = @transform_8, window_bounds = array<i64: 2, 144>}, {pipeline_mode = #tpu.pipeline_mode<synchronous>, transform_indices = @transform_9, window_bounds = array<i64: 2, 1>}, {transform_indices = @transform_10, window_bounds = array<i64: 1, 6, 256>}]} {
    %c0 = arith.constant 0 : index
    %c0_0 = arith.constant 0 : index
    %0 = vector.load %arg3[%c0, %c0_0] : memref<9x256xf32, #tpu.memory_space<vmem>>, vector<9x256xf32>
    %c0_1 = arith.constant 0 : index
    %c0_2 = arith.constant 0 : index
    %1 = vector.load %arg4[%c0_1, %c0_2] : memref<2x256xf32, #tpu.memory_space<vmem>>, vector<2x256xf32>
    %c0_3 = arith.constant 0 : index
    %c0_4 = arith.constant 0 : index
    %2 = vector.load %arg5[%c0_3, %c0_4] : memref<256x256xf32, #tpu.memory_space<vmem>>, vector<256x256xf32>
    %c0_5 = arith.constant 0 : index
    %c0_6 = arith.constant 0 : index
    %3 = vector.load %arg6[%c0_5, %c0_6] : memref<256x256xf32, #tpu.memory_space<vmem>>, vector<256x256xf32>
    %c0_7 = arith.constant 0 : index
    %c0_8 = arith.constant 0 : index
    %4 = vector.load %arg7[%c0_7, %c0_8] : memref<16x72xbf16, #tpu.memory_space<vmem>>, vector<16x72xbf16>
    %c0_9 = arith.constant 0 : index
    %c0_10 = arith.constant 0 : index
    %5 = vector.load %arg8[%c0_9, %c0_10] : memref<16x1xf32, #tpu.memory_space<vmem>>, vector<16x1xf32>
    %c0_11 = arith.constant 0 : index
    %c0_12 = arith.constant 0 : index
    %6 = vector.load %arg9[%c0_11, %c0_12] : memref<2x144xbf16, #tpu.memory_space<vmem>>, vector<2x144xbf16>
    %c0_13 = arith.constant 0 : index
    %c0_14 = arith.constant 0 : index
    %7 = vector.load %arg10[%c0_13, %c0_14] : memref<2x1xf32, #tpu.memory_space<vmem>>, vector<2x1xf32>
    %c0_15 = arith.constant 0 : index
    %c0_16 = arith.constant 0 : index
    %c0_17 = arith.constant 0 : index
    %8 = vector.load %arg1[%c0_15, %c0_16, %c0_17] : memref<1x4x256xf32, #tpu.memory_space<vmem>>, vector<1x4x256xf32>
    %9 = vector.shape_cast %8 : vector<1x4x256xf32> to vector<4x256xf32>
    %c0_18 = arith.constant 0 : index
    %c0_19 = arith.constant 0 : index
    %c0_20 = arith.constant 0 : index
    %10 = vector.load %arg2[%c0_18, %c0_19, %c0_20] : memref<1x4x256xf32, #tpu.memory_space<vmem>>, vector<1x4x256xf32>
    %11 = vector.shape_cast %10 : vector<1x4x256xf32> to vector<4x256xf32>
    %12 = tpu.concatenate %9, %11 in 0 : vector<4x256xf32>, vector<4x256xf32> -> vector<8x256xf32>
    %c17_i32 = arith.constant 17 : i32
    %13 = tpu.dynamic_rotate %12 by %c17_i32 dim 1 : vector<8x256xf32>, i32 -> vector<8x256xf32>
    %14 = vector.extract_strided_slice %0 {offsets = [0, 0], sizes = [1, 256], strides = [1, 1]} : vector<9x256xf32> to vector<1x256xf32>
    %15 = vector.broadcast %14 : vector<1x256xf32> to vector<8x256xf32>
    %16 = arith.mulf %13, %15 : vector<8x256xf32>
    %c16_i32 = arith.constant 16 : i32
    %17 = tpu.dynamic_rotate %12 by %c16_i32 dim 1 : vector<8x256xf32>, i32 -> vector<8x256xf32>
    %18 = vector.extract_strided_slice %0 {offsets = [1, 0], sizes = [1, 256], strides = [1, 1]} : vector<9x256xf32> to vector<1x256xf32>
    %19 = vector.broadcast %18 : vector<1x256xf32> to vector<8x256xf32>
    %20 = arith.mulf %17, %19 : vector<8x256xf32>
    %c15_i32 = arith.constant 15 : i32
    %21 = tpu.dynamic_rotate %12 by %c15_i32 dim 1 : vector<8x256xf32>, i32 -> vector<8x256xf32>
    %22 = vector.extract_strided_slice %0 {offsets = [2, 0], sizes = [1, 256], strides = [1, 1]} : vector<9x256xf32> to vector<1x256xf32>
    %23 = vector.broadcast %22 : vector<1x256xf32> to vector<8x256xf32>
    %24 = arith.mulf %21, %23 : vector<8x256xf32>
    %c1_i32 = arith.constant 1 : i32
    %25 = tpu.dynamic_rotate %12 by %c1_i32 dim 1 : vector<8x256xf32>, i32 -> vector<8x256xf32>
    %26 = vector.extract_strided_slice %0 {offsets = [3, 0], sizes = [1, 256], strides = [1, 1]} : vector<9x256xf32> to vector<1x256xf32>
    %27 = vector.broadcast %26 : vector<1x256xf32> to vector<8x256xf32>
    %28 = arith.mulf %25, %27 : vector<8x256xf32>
    %c255_i32 = arith.constant 255 : i32
    %29 = tpu.dynamic_rotate %12 by %c255_i32 dim 1 : vector<8x256xf32>, i32 -> vector<8x256xf32>
    %30 = vector.extract_strided_slice %0 {offsets = [5, 0], sizes = [1, 256], strides = [1, 1]} : vector<9x256xf32> to vector<1x256xf32>
    %31 = vector.broadcast %30 : vector<1x256xf32> to vector<8x256xf32>
    %32 = arith.mulf %29, %31 : vector<8x256xf32>
    %c241_i32 = arith.constant 241 : i32
    %33 = tpu.dynamic_rotate %12 by %c241_i32 dim 1 : vector<8x256xf32>, i32 -> vector<8x256xf32>
    %34 = vector.extract_strided_slice %0 {offsets = [6, 0], sizes = [1, 256], strides = [1, 1]} : vector<9x256xf32> to vector<1x256xf32>
    %35 = vector.broadcast %34 : vector<1x256xf32> to vector<8x256xf32>
    %36 = arith.mulf %33, %35 : vector<8x256xf32>
    %c240_i32 = arith.constant 240 : i32
    %37 = tpu.dynamic_rotate %12 by %c240_i32 dim 1 : vector<8x256xf32>, i32 -> vector<8x256xf32>
    %38 = vector.extract_strided_slice %0 {offsets = [7, 0], sizes = [1, 256], strides = [1, 1]} : vector<9x256xf32> to vector<1x256xf32>
    %39 = vector.broadcast %38 : vector<1x256xf32> to vector<8x256xf32>
    %40 = arith.mulf %37, %39 : vector<8x256xf32>
    %c239_i32 = arith.constant 239 : i32
    %41 = tpu.dynamic_rotate %12 by %c239_i32 dim 1 : vector<8x256xf32>, i32 -> vector<8x256xf32>
    %42 = vector.extract_strided_slice %0 {offsets = [8, 0], sizes = [1, 256], strides = [1, 1]} : vector<9x256xf32> to vector<1x256xf32>
    %43 = vector.broadcast %42 : vector<1x256xf32> to vector<8x256xf32>
    %44 = arith.mulf %41, %43 : vector<8x256xf32>
    %45 = tpu.concatenate %16, %20, %24, %28, %12, %32, %36, %40, %44 in 0 : vector<8x256xf32>, vector<8x256xf32>, vector<8x256xf32>, vector<8x256xf32>, vector<8x256xf32>, vector<8x256xf32>, vector<8x256xf32>, vector<8x256xf32>, vector<8x256xf32> -> vector<72x256xf32>
    %46 = arith.truncf %45 : vector<72x256xf32> to vector<72x256xbf16>
    %cst = arith.constant dense<0.000000e+00> : vector<16x256xf32>
    %47 = tpu.matmul %4, %46, %cst {dimension_numbers = #tpu.dot_dimension_numbers<[1], [0], [0], [1], [0, 0, 1, 1], [], []>} : vector<16x72xbf16>, vector<72x256xbf16>, vector<16x256xf32> -> vector<16x256xf32>
    %48 = vector.broadcast %5 : vector<16x1xf32> to vector<16x256xf32>
    %49 = arith.addf %47, %48 : vector<16x256xf32>
    %cst_21 = arith.constant 0.000000e+00 : f32
    %50 = vector.broadcast %cst_21 : f32 to vector<16x256xf32>
    %51 = arith.cmpf oge, %49, %50 : vector<16x256xf32>
    %cst_22 = arith.constant 2.000000e-01 : f32
    %52 = vector.broadcast %cst_22 : f32 to vector<16x256xf32>
    %53 = arith.mulf %52, %49 : vector<16x256xf32>
    %54 = arith.select %51, %49, %53 : vector<16x256xi1>, vector<16x256xf32>
    %c17_i32_23 = arith.constant 17 : i32
    %55 = tpu.dynamic_rotate %54 by %c17_i32_23 dim 1 : vector<16x256xf32>, i32 -> vector<16x256xf32>
    %56 = vector.extract_strided_slice %0 {offsets = [0, 0], sizes = [1, 256], strides = [1, 1]} : vector<9x256xf32> to vector<1x256xf32>
    %57 = vector.broadcast %56 : vector<1x256xf32> to vector<16x256xf32>
    %58 = arith.mulf %55, %57 : vector<16x256xf32>
    %c16_i32_24 = arith.constant 16 : i32
    %59 = tpu.dynamic_rotate %54 by %c16_i32_24 dim 1 : vector<16x256xf32>, i32 -> vector<16x256xf32>
    %60 = vector.extract_strided_slice %0 {offsets = [1, 0], sizes = [1, 256], strides = [1, 1]} : vector<9x256xf32> to vector<1x256xf32>
    %61 = vector.broadcast %60 : vector<1x256xf32> to vector<16x256xf32>
    %62 = arith.mulf %59, %61 : vector<16x256xf32>
    %c15_i32_25 = arith.constant 15 : i32
    %63 = tpu.dynamic_rotate %54 by %c15_i32_25 dim 1 : vector<16x256xf32>, i32 -> vector<16x256xf32>
    %64 = vector.extract_strided_slice %0 {offsets = [2, 0], sizes = [1, 256], strides = [1, 1]} : vector<9x256xf32> to vector<1x256xf32>
    %65 = vector.broadcast %64 : vector<1x256xf32> to vector<16x256xf32>
    %66 = arith.mulf %63, %65 : vector<16x256xf32>
    %c1_i32_26 = arith.constant 1 : i32
    %67 = tpu.dynamic_rotate %54 by %c1_i32_26 dim 1 : vector<16x256xf32>, i32 -> vector<16x256xf32>
    %68 = vector.extract_strided_slice %0 {offsets = [3, 0], sizes = [1, 256], strides = [1, 1]} : vector<9x256xf32> to vector<1x256xf32>
    %69 = vector.broadcast %68 : vector<1x256xf32> to vector<16x256xf32>
    %70 = arith.mulf %67, %69 : vector<16x256xf32>
    %c255_i32_27 = arith.constant 255 : i32
    %71 = tpu.dynamic_rotate %54 by %c255_i32_27 dim 1 : vector<16x256xf32>, i32 -> vector<16x256xf32>
    %72 = vector.extract_strided_slice %0 {offsets = [5, 0], sizes = [1, 256], strides = [1, 1]} : vector<9x256xf32> to vector<1x256xf32>
    %73 = vector.broadcast %72 : vector<1x256xf32> to vector<16x256xf32>
    %74 = arith.mulf %71, %73 : vector<16x256xf32>
    %c241_i32_28 = arith.constant 241 : i32
    %75 = tpu.dynamic_rotate %54 by %c241_i32_28 dim 1 : vector<16x256xf32>, i32 -> vector<16x256xf32>
    %76 = vector.extract_strided_slice %0 {offsets = [6, 0], sizes = [1, 256], strides = [1, 1]} : vector<9x256xf32> to vector<1x256xf32>
    %77 = vector.broadcast %76 : vector<1x256xf32> to vector<16x256xf32>
    %78 = arith.mulf %75, %77 : vector<16x256xf32>
    %c240_i32_29 = arith.constant 240 : i32
    %79 = tpu.dynamic_rotate %54 by %c240_i32_29 dim 1 : vector<16x256xf32>, i32 -> vector<16x256xf32>
    %80 = vector.extract_strided_slice %0 {offsets = [7, 0], sizes = [1, 256], strides = [1, 1]} : vector<9x256xf32> to vector<1x256xf32>
    %81 = vector.broadcast %80 : vector<1x256xf32> to vector<16x256xf32>
    %82 = arith.mulf %79, %81 : vector<16x256xf32>
    %c239_i32_30 = arith.constant 239 : i32
    %83 = tpu.dynamic_rotate %54 by %c239_i32_30 dim 1 : vector<16x256xf32>, i32 -> vector<16x256xf32>
    %84 = vector.extract_strided_slice %0 {offsets = [8, 0], sizes = [1, 256], strides = [1, 1]} : vector<9x256xf32> to vector<1x256xf32>
    %85 = vector.broadcast %84 : vector<1x256xf32> to vector<16x256xf32>
    %86 = arith.mulf %83, %85 : vector<16x256xf32>
    %87 = tpu.concatenate %58, %62, %66, %70, %54, %74, %78, %82, %86 in 0 : vector<16x256xf32>, vector<16x256xf32>, vector<16x256xf32>, vector<16x256xf32>, vector<16x256xf32>, vector<16x256xf32>, vector<16x256xf32>, vector<16x256xf32>, vector<16x256xf32> -> vector<144x256xf32>
    %88 = arith.truncf %87 : vector<144x256xf32> to vector<144x256xbf16>
    %cst_31 = arith.constant dense<0.000000e+00> : vector<2x256xf32>
    %89 = tpu.matmul %6, %88, %cst_31 {dimension_numbers = #tpu.dot_dimension_numbers<[1], [0], [0], [1], [0, 0, 1, 1], [], []>} : vector<2x144xbf16>, vector<144x256xbf16>, vector<2x256xf32> -> vector<2x256xf32>
    %90 = vector.broadcast %7 : vector<2x1xf32> to vector<2x256xf32>
    %91 = arith.addf %89, %90 : vector<2x256xf32>
    %92 = vector.extract_strided_slice %1 {offsets = [0, 0], sizes = [1, 256], strides = [1, 1]} : vector<2x256xf32> to vector<1x256xf32>
    %93 = vector.extract_strided_slice %91 {offsets = [0, 0], sizes = [1, 256], strides = [1, 1]} : vector<2x256xf32> to vector<1x256xf32>
    %94 = arith.addf %92, %93 : vector<1x256xf32>
    %95 = vector.extract_strided_slice %1 {offsets = [1, 0], sizes = [1, 256], strides = [1, 1]} : vector<2x256xf32> to vector<1x256xf32>
    %96 = vector.extract_strided_slice %91 {offsets = [1, 0], sizes = [1, 256], strides = [1, 1]} : vector<2x256xf32> to vector<1x256xf32>
    %97 = arith.addf %95, %96 : vector<1x256xf32>
    %98 = vector.broadcast %94 : vector<1x256xf32> to vector<256x256xf32>
    %99 = arith.subf %2, %98 : vector<256x256xf32>
    %100 = math.absf %99 : vector<256x256xf32>
    %cst_32 = arith.constant 1.000000e+00 : f32
    %101 = vector.broadcast %cst_32 : f32 to vector<256x256xf32>
    %102 = arith.subf %101, %100 : vector<256x256xf32>
    %cst_33 = arith.constant 0.000000e+00 : f32
    %103 = vector.broadcast %cst_33 : f32 to vector<256x256xf32>
    %104 = arith.maximumf %102, %103 : vector<256x256xf32>
    %105 = vector.broadcast %97 : vector<1x256xf32> to vector<256x256xf32>
    %106 = arith.subf %3, %105 : vector<256x256xf32>
    %107 = math.absf %106 : vector<256x256xf32>
    %cst_34 = arith.constant 1.000000e+00 : f32
    %108 = vector.broadcast %cst_34 : f32 to vector<256x256xf32>
    %109 = arith.subf %108, %107 : vector<256x256xf32>
    %cst_35 = arith.constant 0.000000e+00 : f32
    %110 = vector.broadcast %cst_35 : f32 to vector<256x256xf32>
    %111 = arith.maximumf %109, %110 : vector<256x256xf32>
    %112 = arith.mulf %104, %111 : vector<256x256xf32>
    %113 = arith.truncf %112 : vector<256x256xf32> to vector<256x256xbf16>
    %114 = arith.truncf %11 : vector<4x256xf32> to vector<4x256xbf16>
    %cst_36 = arith.constant dense<0.000000e+00> : vector<4x256xf32>
    %115 = tpu.matmul %114, %113, %cst_36 {dimension_numbers = #tpu.dot_dimension_numbers<[1], [0], [0], [1], [0, 0, 1, 1], [], []>} : vector<4x256xbf16>, vector<256x256xbf16>, vector<4x256xf32> -> vector<4x256xf32>
    %116 = tpu.concatenate %115, %91 in 0 : vector<4x256xf32>, vector<2x256xf32> -> vector<6x256xf32>
    %c0_37 = arith.constant 0 : index
    %c0_38 = arith.constant 0 : index
    %c0_39 = arith.constant 0 : index
    %117 = vector.load %arg11[%c0_37, %c0_38, %c0_39] : memref<1x6x256xf32, #tpu.memory_space<vmem>>, vector<1x6x256xf32>
    %118 = vector.shape_cast %117 : vector<1x6x256xf32> to vector<6x256xf32>
    %119 = vector.shape_cast %116 : vector<6x256xf32> to vector<1x6x256xf32>
    tpu.vector_store %arg11[%c0_37, %c0_38, %c0_39], %119 {strides = array<i32>} : memref<1x6x256xf32, #tpu.memory_space<vmem>>, vector<1x6x256xf32>,
    return
  }
  func.func @transform_0(%arg0: i32) -> (i32, i32, i32) {
    %c0_i32 = arith.constant 0 : i32
    %c0_i32_0 = arith.constant 0 : i32
    %c0_i32_1 = arith.constant 0 : i32
    return %arg0, %c0_i32, %c0_i32_0 : i32, i32, i32
  }
  func.func @transform_1(%arg0: i32) -> (i32, i32, i32) {
    %c0_i32 = arith.constant 0 : i32
    %c0_i32_0 = arith.constant 0 : i32
    %c0_i32_1 = arith.constant 0 : i32
    return %arg0, %c0_i32, %c0_i32_0 : i32, i32, i32
  }
  func.func @transform_2(%arg0: i32) -> (i32, i32) {
    %c0_i32 = arith.constant 0 : i32
    %c0_i32_0 = arith.constant 0 : i32
    %c0_i32_1 = arith.constant 0 : i32
    return %c0_i32, %c0_i32_0 : i32, i32
  }
  func.func @transform_3(%arg0: i32) -> (i32, i32) {
    %c0_i32 = arith.constant 0 : i32
    %c0_i32_0 = arith.constant 0 : i32
    %c0_i32_1 = arith.constant 0 : i32
    return %c0_i32, %c0_i32_0 : i32, i32
  }
  func.func @transform_4(%arg0: i32) -> (i32, i32) {
    %c0_i32 = arith.constant 0 : i32
    %c0_i32_0 = arith.constant 0 : i32
    %c0_i32_1 = arith.constant 0 : i32
    return %c0_i32, %c0_i32_0 : i32, i32
  }
  func.func @transform_5(%arg0: i32) -> (i32, i32) {
    %c0_i32 = arith.constant 0 : i32
    %c0_i32_0 = arith.constant 0 : i32
    %c0_i32_1 = arith.constant 0 : i32
    return %c0_i32, %c0_i32_0 : i32, i32
  }
  func.func @transform_6(%arg0: i32) -> (i32, i32) {
    %c0_i32 = arith.constant 0 : i32
    %c0_i32_0 = arith.constant 0 : i32
    %c0_i32_1 = arith.constant 0 : i32
    return %c0_i32, %c0_i32_0 : i32, i32
  }
  func.func @transform_7(%arg0: i32) -> (i32, i32) {
    %c0_i32 = arith.constant 0 : i32
    %c0_i32_0 = arith.constant 0 : i32
    %c0_i32_1 = arith.constant 0 : i32
    return %c0_i32, %c0_i32_0 : i32, i32
  }
  func.func @transform_8(%arg0: i32) -> (i32, i32) {
    %c0_i32 = arith.constant 0 : i32
    %c0_i32_0 = arith.constant 0 : i32
    %c0_i32_1 = arith.constant 0 : i32
    return %c0_i32, %c0_i32_0 : i32, i32
  }
  func.func @transform_9(%arg0: i32) -> (i32, i32) {
    %c0_i32 = arith.constant 0 : i32
    %c0_i32_0 = arith.constant 0 : i32
    %c0_i32_1 = arith.constant 0 : i32
    return %c0_i32, %c0_i32_0 : i32, i32
  }
  func.func @transform_10(%arg0: i32) -> (i32, i32, i32) {
    %c0_i32 = arith.constant 0 : i32
    %c0_i32_0 = arith.constant 0 : i32
    %c0_i32_1 = arith.constant 0 : i32
    return %arg0, %c0_i32, %c0_i32_0 : i32, i32, i32
  }
}

</mosaic_0001>

<llo_original>
// kernel: tpu_custom_call.1
$region0: #{tpu_custom_call.1}
  #allocation0 [shape = 'u32[]', space=smem, size = 0x4, offset = 0x4, fixed_abs, tag = 'smem constant byte address 0x4 - core index']
  #allocation1 [shape = 'u32[144,128]{1,0:T(1,128)}', space=vmem, size = 0x12000, scoped, tag = 'internal scratch']
  %s0 = inlined_call_operand.vmem [shape: f32[2,4,256], index: 0, kind: input, shape index: {}]
  %s1 = inlined_call_operand.hbm [shape: f32[2,4,256], index: 1, kind: input, shape index: {}]
  %s2 = inlined_call_operand.hbm [shape: f32[9,256], index: 2, kind: input, shape index: {}]
  %s3 = inlined_call_operand.hbm [shape: f32[2,256], index: 3, kind: input, shape index: {}]
  %s4 = inlined_call_operand.hbm [shape: f32[256,256], index: 4, kind: input, shape index: {}]
  %s5 = inlined_call_operand.hbm [shape: f32[256,256], index: 5, kind: input, shape index: {}]
  %s6 = inlined_call_operand.vmem [shape: bf16[16,72], index: 6, kind: input, shape index: {}]
  %s7 = inlined_call_operand.vmem [shape: f32[16,1], index: 7, kind: input, shape index: {}]
  %s8 = inlined_call_operand.vmem [shape: bf16[2,144], index: 8, kind: input, shape index: {}]
  %s9 = inlined_call_operand.vmem [shape: f32[2,1], index: 9, kind: input, shape index: {}]
  %s10 = inlined_call_operand.vmem [shape: f32[2,6,256], index: 10, kind: output, shape index: {}]
  %s11 = sld [smem:[#allocation0]]
  $region93: #{tpu_custom_call.1} parent=0
    _
  %s13 = ssub.s32 1, %s11
  %s14 = scalar_select 0, %s13, %s11
  $region1: #{tpu_custom_call.1} parent=0
    #allocation2 [shape = 'u8[8192]{0}', space=vmem, size = 0x2000, scoped, tag = 'input window, operand 1']
    #allocation3 [shape = 's32[2]{0}', space=sflag, size = 0x8, scoped, tag = 'scoped memory for tpu_custom_call.1']
    #allocation4 [shape = 'u8[16384]{0}', space=vmem, size = 0x4000, scoped, tag = 'input window, operand 2, single buffered']
    #allocation5 [shape = 's32[1]{0}', space=sflag, size = 0x4, scoped, tag = 'scoped memory for tpu_custom_call.1']
    #allocation6 [shape = 'u8[2048]{0}', space=vmem, size = 0x800, scoped, tag = 'input window, operand 3, single buffered']
    #allocation7 [shape = 'u8[262144]{0}', space=vmem, size = 0x40000, scoped, tag = 'input window, operand 4, single buffered']
    #allocation8 [shape = 's32[1]{0}', space=sflag, size = 0x4, scoped, tag = 'scoped memory for tpu_custom_call.1']
    #allocation9 [shape = 'u8[262144]{0}', space=vmem, size = 0x40000, scoped, tag = 'input window, operand 5, single buffered']
    %15 = vsyncpa [#allocation3], 0
    %s16 = scalar_lea.sflag [#allocation3], 1
    %17 = vsyncpa %s16, 0
    %18 = vsyncpa [#allocation5], 0
    %19 = vsyncpa [#allocation8], 0
    loop: start=0, step=1, limit=4
    $region2: #{tpu_custom_call.1} parent=1 // loop_pre_header
      _
    $region3: #{tpu_custom_call.1} parent=1 // loop_header
      %s21 = sphi 0, %s25
      %p22 = scmp.ge.s32.totalorder %s21, 4
      %s31 = sphi 0, %s33
      %s34 = sphi 0, %s31
      %s35 = sphi 0, %s34
      %s51 = sphi 0, %s35
      %s57 = sphi 0, %s59
      %s60 = sphi 0, %s57
      %s61 = sphi 0, %s60
      %s77 = sphi 0, %s61
      %s81 = sphi 0, %s81
      %s83 = sphi 0, %s81
      %s84 = sphi 0, %s83
      %s98 = sphi 0, %s84
      %s102 = sphi 0, %s102
      %s104 = sphi 0, %s102
      %s105 = sphi 0, %s104
      %s119 = sphi 0, %s105
      %s123 = sphi 0, %s123
      %s125 = sphi 0, %s123
      %s126 = sphi 0, %s125
      %s140 = sphi 0, %s126
      %s144 = sphi 0, %s144
      %s146 = sphi 0, %s144
      %s147 = sphi 0, %s146
      %s161 = sphi 0, %s147
      %s165 = sphi 0, %s165
      %s167 = sphi 0, %s165
      %s168 = sphi 0, %s167
      %s182 = sphi 0, %s168
      %s186 = sphi 0, %s186
      %s188 = sphi 0, %s186
      %s189 = sphi 0, %s188
      %s203 = sphi 0, %s189
      %s207 = sphi 0, %s207
      %s209 = sphi 0, %s207
      %s210 = sphi 0, %s209
      %s224 = sphi 0, %s210
      %s228 = sphi 0, %s228
      %s230 = sphi 0, %s228
      %s231 = sphi 0, %s230
      %s245 = sphi 0, %s231
      %s251 = sphi 0, %s253
      %s254 = sphi 0, %s251
      %s255 = sphi 0, %s254
      %s271 = sphi 0, %s255
    $region4: #{tpu_custom_call.1} parent=1 // loop_header_branch
      %24 = sbr.rel (%p22) target = $region8
    $region5: #{tpu_custom_call.1} parent=1 // loop_body
      %s26 = ssub.s32 %s21, 1
      %s27 = ssub.s32 %s21, 2
      %s28 = sadd.s32 %s21, 1
      %s29 = ssub.s32 %s21, %s28
      %p30 = scmp.eq.s32.totalorder %s29, 0
      %s32 = sadd.s32 %s31, 1
      %s33 = scalar_select %p30, %s31, %s32
      %p36 = pneg %p30
      %p37 = scmp.eq.s32.totalorder %s21, 1
      %p38 = por %p36, %p37
      %p39 = scmp.ne.s32.totalorder %s31, %s34
      %p40 = scmp.eq.s32.totalorder %s21, 0
      %p41 = por %p39, %p40
      %p42 = scmp.ne.s32.totalorder %s31, %s34
      %p43 = scmp.eq.s32.totalorder %s26, 1
      %p44 = por %p42, %p43
      %p45 = scmp.ne.s32.totalorder %s34, %s35
      %p46 = scmp.eq.s32.totalorder %s26, 0
      %p47 = por %p45, %p46
      %p48 = scmp.ne.s32.totalorder %s34, %s35
      %p49 = scmp.eq.s32.totalorder %s27, 1
      %p50 = por %p48, %p49
      %p52 = scmp.ne.s32.totalorder %s35, %s51
      %p53 = scmp.eq.s32.totalorder %s27, 0
      %p54 = por %p52, %p53
      %s55 = ssub.s32 %s21, %s28
      %p56 = scmp.eq.s32.totalorder %s55, 0
      %s58 = sadd.s32 %s57, 1
      %s59 = scalar_select %p56, %s57, %s58
      %p62 = pneg %p56
      %p63 = scmp.eq.s32.totalorder %s21, 1
      %p64 = por %p62, %p63
      %p65 = scmp.ne.s32.totalorder %s57, %s60
      %p66 = scmp.eq.s32.totalorder %s21, 0
      %p67 = por %p65, %p66
      %p68 = scmp.ne.s32.totalorder %s57, %s60
      %p69 = scmp.eq.s32.totalorder %s26, 1
      %p70 = por %p68, %p69
      %p71 = scmp.ne.s32.totalorder %s60, %s61
      %p72 = scmp.eq.s32.totalorder %s26, 0
      %p73 = por %p71, %p72
      %p74 = scmp.ne.s32.totalorder %s60, %s61
      %p75 = scmp.eq.s32.totalorder %s27, 1
      %p76 = por %p74, %p75
      %p78 = scmp.ne.s32.totalorder %s61, %s77
      %p79 = scmp.eq.s32.totalorder %s27, 0
      %p80 = por %p78, %p79
      %s82 = sadd.s32 %s81, 1
      %p85 = scmp.eq.s32.totalorder %s21, 1
      %p86 = scmp.ne.s32.totalorder %s81, %s83
      %p87 = scmp.eq.s32.totalorder %s21, 0
      %p88 = por %p86, %p87
      %p89 = scmp.ne.s32.totalorder %s81, %s83
      %p90 = scmp.eq.s32.totalorder %s26, 1
      %p91 = por %p89, %p90
      %p92 = scmp.ne.s32.totalorder %s83, %s84
      %p93 = scmp.eq.s32.totalorder %s26, 0
      %p94 = por %p92, %p93
      %p95 = scmp.ne.s32.totalorder %s83, %s84
      %p96 = scmp.eq.s32.totalorder %s27, 1
      %p97 = por %p95, %p96
      %p99 = scmp.ne.s32.totalorder %s84, %s98
      %p100 = scmp.eq.s32.totalorder %s27, 0
      %p101 = por %p99, %p100
      %s103 = sadd.s32 %s102, 1
      %p106 = scmp.eq.s32.totalorder %s21, 1
      %p107 = scmp.ne.s32.totalorder %s102, %s104
      %p108 = scmp.eq.s32.totalorder %s21, 0
      %p109 = por %p107, %p108
      %p110 = scmp.ne.s32.totalorder %s102, %s104
      %p111 = scmp.eq.s32.totalorder %s26, 1
      %p112 = por %p110, %p111
      %p113 = scmp.ne.s32.totalorder %s104, %s105
      %p114 = scmp.eq.s32.totalorder %s26, 0
      %p115 = por %p113, %p114
      %p116 = scmp.ne.s32.totalorder %s104, %s105
      %p117 = scmp.eq.s32.totalorder %s27, 1
      %p118 = por %p116, %p117
      %p120 = scmp.ne.s32.totalorder %s105, %s119
      %p121 = scmp.eq.s32.totalorder %s27, 0
      %p122 = por %p120, %p121
      %s124 = sadd.s32 %s123, 1
      %p127 = scmp.eq.s32.totalorder %s21, 1
      %p128 = scmp.ne.s32.totalorder %s123, %s125
      %p129 = scmp.eq.s32.totalorder %s21, 0
      %p130 = por %p128, %p129
      %p131 = scmp.ne.s32.totalorder %s123, %s125
      %p132 = scmp.eq.s32.totalorder %s26, 1
      %p133 = por %p131, %p132
      %p134 = scmp.ne.s32.totalorder %s125, %s126
      %p135 = scmp.eq.s32.totalorder %s26, 0
      %p136 = por %p134, %p135
      %p137 = scmp.ne.s32.totalorder %s125, %s126
      %p138 = scmp.eq.s32.totalorder %s27, 1
      %p139 = por %p137, %p138
      %p141 = scmp.ne.s32.totalorder %s126, %s140
      %p142 = scmp.eq.s32.totalorder %s27, 0
      %p143 = por %p141, %p142
      %s145 = sadd.s32 %s144, 1
      %p148 = scmp.eq.s32.totalorder %s21, 1
      %p149 = scmp.ne.s32.totalorder %s144, %s146
      %p150 = scmp.eq.s32.totalorder %s21, 0
      %p151 = por %p149, %p150
      %p152 = scmp.ne.s32.totalorder %s144, %s146
      %p153 = scmp.eq.s32.totalorder %s26, 1
      %p154 = por %p152, %p153
      %p155 = scmp.ne.s32.totalorder %s146, %s147
      %p156 = scmp.eq.s32.totalorder %s26, 0
      %p157 = por %p155, %p156
      %p158 = scmp.ne.s32.totalorder %s146, %s147
      %p159 = scmp.eq.s32.totalorder %s27, 1
      %p160 = por %p158, %p159
      %p162 = scmp.ne.s32.totalorder %s147, %s161
      %p163 = scmp.eq.s32.totalorder %s27, 0
      %p164 = por %p162, %p163
      %s166 = sadd.s32 %s165, 1
      %p169 = scmp.eq.s32.totalorder %s21, 1
      %p170 = scmp.ne.s32.totalorder %s165, %s167
      %p171 = scmp.eq.s32.totalorder %s21, 0
      %p172 = por %p170, %p171
      %p173 = scmp.ne.s32.totalorder %s165, %s167
      %p174 = scmp.eq.s32.totalorder %s26, 1
      %p175 = por %p173, %p174
      %p176 = scmp.ne.s32.totalorder %s167, %s168
      %p177 = scmp.eq.s32.totalorder %s26, 0
      %p178 = por %p176, %p177
      %p179 = scmp.ne.s32.totalorder %s167, %s168
      %p180 = scmp.eq.s32.totalorder %s27, 1
      %p181 = por %p179, %p180
      %p183 = scmp.ne.s32.totalorder %s168, %s182
      %p184 = scmp.eq.s32.totalorder %s27, 0
      %p185 = por %p183, %p184
      %s187 = sadd.s32 %s186, 1
      %p190 = scmp.eq.s32.totalorder %s21, 1
      %p191 = scmp.ne.s32.totalorder %s186, %s188
      %p192 = scmp.eq.s32.totalorder %s21, 0
      %p193 = por %p191, %p192
      %p194 = scmp.ne.s32.totalorder %s186, %s188
      %p195 = scmp.eq.s32.totalorder %s26, 1
      %p196 = por %p194, %p195
      %p197 = scmp.ne.s32.totalorder %s188, %s189
      %p198 = scmp.eq.s32.totalorder %s26, 0
      %p199 = por %p197, %p198
      %p200 = scmp.ne.s32.totalorder %s188, %s189
      %p201 = scmp.eq.s32.totalorder %s27, 1
      %p202 = por %p200, %p201
      %p204 = scmp.ne.s32.totalorder %s189, %s203
      %p205 = scmp.eq.s32.totalorder %s27, 0
      %p206 = por %p204, %p205
      %s208 = sadd.s32 %s207, 1
      %p211 = scmp.eq.s32.totalorder %s21, 1
      %p212 = scmp.ne.s32.totalorder %s207, %s209
      %p213 = scmp.eq.s32.totalorder %s21, 0
      %p214 = por %p212, %p213
      %p215 = scmp.ne.s32.totalorder %s207, %s209
      %p216 = scmp.eq.s32.totalorder %s26, 1
      %p217 = por %p215, %p216
      %p218 = scmp.ne.s32.totalorder %s209, %s210
      %p219 = scmp.eq.s32.totalorder %s26, 0
      %p220 = por %p218, %p219
      %p221 = scmp.ne.s32.totalorder %s209, %s210
      %p222 = scmp.eq.s32.totalorder %s27, 1
      %p223 = por %p221, %p222
      %p225 = scmp.ne.s32.totalorder %s210, %s224
      %p226 = scmp.eq.s32.totalorder %s27, 0
      %p227 = por %p225, %p226
      %s229 = sadd.s32 %s228, 1
      %p232 = scmp.eq.s32.totalorder %s21, 1
      %p233 = scmp.ne.s32.totalorder %s228, %s230
      %p234 = scmp.eq.s32.totalorder %s21, 0
      %p235 = por %p233, %p234
      %p236 = scmp.ne.s32.totalorder %s228, %s230
      %p237 = scmp.eq.s32.totalorder %s26, 1
      %p238 = por %p236, %p237
      %p239 = scmp.ne.s32.totalorder %s230, %s231
      %p240 = scmp.eq.s32.totalorder %s26, 0
      %p241 = por %p239, %p240
      %p242 = scmp.ne.s32.totalorder %s230, %s231
      %p243 = scmp.eq.s32.totalorder %s27, 1
      %p244 = por %p242, %p243
      %p246 = scmp.ne.s32.totalorder %s231, %s245
      %p247 = scmp.eq.s32.totalorder %s27, 0
      %p248 = por %p246, %p247
      %s249 = ssub.s32 %s21, %s28
      %p250 = scmp.eq.s32.totalorder %s249, 0
      %s252 = sadd.s32 %s251, 1
      %s253 = scalar_select %p250, %s251, %s252
      %p256 = pneg %p250
      %p257 = scmp.eq.s32.totalorder %s21, 1
      %p258 = por %p256, %p257
      %p259 = scmp.ne.s32.totalorder %s251, %s254
      %p260 = scmp.eq.s32.totalorder %s21, 0
      %p261 = por %p259, %p260
      %p262 = scmp.ne.s32.totalorder %s251, %s254
      %p263 = scmp.eq.s32.totalorder %s26, 1
      %p264 = por %p262, %p263
      %p265 = scmp.ne.s32.totalorder %s254, %s255
      %p266 = scmp.eq.s32.totalorder %s26, 0
      %p267 = por %p265, %p266
      %p268 = scmp.ne.s32.totalorder %s254, %s255
      %p269 = scmp.eq.s32.totalorder %s27, 1
      %p270 = por %p268, %p269
      %p272 = scmp.ne.s32.totalorder %s255, %s271
      %p273 = scmp.eq.s32.totalorder %s27, 0
      %p274 = por %p272, %p273
      %p275 = scmp.le.s32.totalorder 1, %s21
      %p276 = scmp.lt.s32.totalorder %s21, 3
      %p277 = pnand %p275, %p276
      %p278 = pneg %p277
      // Predicated region
      $region9: #{tpu_custom_call.1} parent=5 // pred_check
        _
      $region10: #{tpu_custom_call.1} parent=5 // pred_check_branch
        %280 = sbr.rel (%p277) target = $region12
      $region11: #{tpu_custom_call.1} parent=5 // pred_region
        %s281 = ssub.s32 %s21, 1
        // Predicated region
        $region13: #{tpu_custom_call.1} parent=11 // pred_check
          %p282 = pneg %p94
        $region14: #{tpu_custom_call.1} parent=11 // pred_check_branch
          %284 = sbr.rel (%p282) target = $region16
        $region15: #{tpu_custom_call.1} parent=11 // pred_region
          %s286 = ssub.s32 512, 512
          %287 = vsyncadd [#allocation5], %s286
          %s288 = sshll.u32 [#allocation4], 4
          %s289 = int_to_ptr.vmem [resolvable:$true] %s288
          %294 = dma.hbm_to_vmem [thread:$0]  %s2, 512, %s289, [#allocation5], 256, 256, 16
        $region16: #{tpu_custom_call.1} parent=11 // pred_fallthru
          _
        // Predicated region
        $region17: #{tpu_custom_call.1} parent=11 // pred_check
          %p295 = pneg %p115
        $region18: #{tpu_custom_call.1} parent=11 // pred_check_branch
          %297 = sbr.rel (%p295) target = $region20
        $region19: #{tpu_custom_call.1} parent=11 // pred_region
          %s299 = ssub.s32 64, 64
          %300 = vsyncadd [#allocation5], %s299
          %s302 = sshll.u32 [#allocation6], 4
          %s303 = int_to_ptr.vmem [resolvable:$true] %s302
          %305 = dma.hbm_to_vmem [thread:$0]  %s3, 64, %s303, [#allocation5]
        $region20: #{tpu_custom_call.1} parent=11 // pred_fallthru
          _
        // Predicated region
        $region21: #{tpu_custom_call.1} parent=11 // pred_check
          %p306 = pneg %p136
        $region22: #{tpu_custom_call.1} parent=11 // pred_check_branch
          %308 = sbr.rel (%p306) target = $region24
        $region23: #{tpu_custom_call.1} parent=11 // pred_region
          %s310 = ssub.s32 8192, 8192
          %311 = vsyncadd [#allocation8], %s310
          %s312 = sshll.u32 [#allocation7], 4
          %s313 = int_to_ptr.vmem [resolvable:$true] %s312
          %318 = dma.hbm_to_vmem [thread:$0]  %s4, 8192, %s313, [#allocation8], 256, 256, 16
        $region24: #{tpu_custom_call.1} parent=11 // pred_fallthru
          _
        // Predicated region
        $region25: #{tpu_custom_call.1} parent=11 // pred_check
          %p319 = pneg %p157
        $region26: #{tpu_custom_call.1} parent=11 // pred_check_branch
          %321 = sbr.rel (%p319) target = $region28
        $region27: #{tpu_custom_call.1} parent=11 // pred_region
          %s323 = ssub.s32 8192, 8192
          %324 = vsyncadd [#allocation8], %s323
          %s325 = sshll.u32 [#allocation9], 4
          %s326 = int_to_ptr.vmem [resolvable:$true] %s325
          %331 = dma.hbm_to_vmem [thread:$0]  %s5, 8192, %s326, [#allocation8], 256, 256, 16
        $region28: #{tpu_custom_call.1} parent=11 // pred_fallthru
          _
        // Predicated region
        $region29: #{tpu_custom_call.1} parent=11 // pred_check
          %p332 = pneg %p178
        $region30: #{tpu_custom_call.1} parent=11 // pred_check_branch
          %334 = sbr.rel (%p332) target = $region32
        $region31: #{tpu_custom_call.1} parent=11 // pred_region
          _
        $region32: #{tpu_custom_call.1} parent=11 // pred_fallthru
          _
        // Predicated region
        $region33: #{tpu_custom_call.1} parent=11 // pred_check
          %p335 = pneg %p199
        $region34: #{tpu_custom_call.1} parent=11 // pred_check_branch
          %337 = sbr.rel (%p335) target = $region36
        $region35: #{tpu_custom_call.1} parent=11 // pred_region
          _
        $region36: #{tpu_custom_call.1} parent=11 // pred_fallthru
          _
        // Predicated region
        $region37: #{tpu_custom_call.1} parent=11 // pred_check
          %p338 = pneg %p220
        $region38: #{tpu_custom_call.1} parent=11 // pred_check_branch
          %340 = sbr.rel (%p338) target = $region40
        $region39: #{tpu_custom_call.1} parent=11 // pred_region
          _
        $region40: #{tpu_custom_call.1} parent=11 // pred_fallthru
          _
        // Predicated region
        $region41: #{tpu_custom_call.1} parent=11 // pred_check
          %p341 = pneg %p241
        $region42: #{tpu_custom_call.1} parent=11 // pred_check_branch
          %343 = sbr.rel (%p341) target = $region44
        $region43: #{tpu_custom_call.1} parent=11 // pred_region
          _
        $region44: #{tpu_custom_call.1} parent=11 // pred_fallthru
          _
      $region12: #{tpu_custom_call.1} parent=5 // pred_fallthru
        _
      %p344 = scmp.lt.s32.totalorder %s21, 2
      // Predicated region
      $region45: #{tpu_custom_call.1} parent=5 // pred_check
        %p345 = pneg %p344
      $region46: #{tpu_custom_call.1} parent=5 // pred_check_branch
        %347 = sbr.rel (%p345) target = $region48
      $region47: #{tpu_custom_call.1} parent=5 // pred_region
        // Predicated region
        $region49: #{tpu_custom_call.1} parent=47 // pred_check
          %p348 = pneg %p41
        $region50: #{tpu_custom_call.1} parent=47 // pred_check_branch
          %350 = sbr.rel (%p348) target = $region52
        $region51: #{tpu_custom_call.1} parent=47 // pred_region
          %p351 = scmp.lt.s32.totalorder %s21, 1
          %s352 = scalar_select %p351, %s21, 1
          %s353 = smul.addr %s352, 2
          %s354 = smul.addr %s353, 4
          %s355 = scalar_lea.vmem %s0, %s354
        $region52: #{tpu_custom_call.1} parent=47 // pred_fallthru
          _
        // Predicated region
        $region53: #{tpu_custom_call.1} parent=47 // pred_check
          %p356 = pneg %p67
        $region54: #{tpu_custom_call.1} parent=47 // pred_check_branch
          %358 = sbr.rel (%p356) target = $region56
        $region55: #{tpu_custom_call.1} parent=47 // pred_region
          %s359 = sand.u32 %s57, 1
          %s360 = scalar_lea.sflag [#allocation3], %s359
          %s361 = sand.u32 %s57, 1
          %s362 = smul.addr %s361, 8
          %s363 = scalar_lea.vmem [#allocation2], %s362
          %s365 = ssub.s32 128, 128
          %366 = vsyncadd %s360, %s365
          %s367 = smul.addr %s21, 2
          %s368 = smul.addr %s367, 64
          %s369 = scalar_lea.hbm %s1, %s368
          %s371 = sshll.u32 %s363, 4
          %s372 = int_to_ptr.vmem [resolvable:$true] %s371
          %374 = dma.hbm_to_vmem [thread:$0]  %s369, 128, %s372, %s360
        $region56: #{tpu_custom_call.1} parent=47 // pred_fallthru
          _
      $region48: #{tpu_custom_call.1} parent=5 // pred_fallthru
        _
      %p375 = scmp.le.s32.totalorder 1, %s21
      %p376 = scmp.lt.s32.totalorder %s21, 3
      %p377 = pnand %p375, %p376
      %p378 = pneg %p377
      // Predicated region
      $region57: #{tpu_custom_call.1} parent=5 // pred_check
        _
      $region58: #{tpu_custom_call.1} parent=5 // pred_check_branch
        %380 = sbr.rel (%p377) target = $region60
      $region59: #{tpu_custom_call.1} parent=5 // pred_region
        %s381 = ssub.s32 %s21, 1
        %s382 = sand.u32 %s60, 1
        %s383 = scalar_lea.sflag [#allocation3], %s382
        %s384 = sand.u32 %s60, 1
        %s385 = smul.addr %s384, 8
        %s386 = scalar_lea.vmem [#allocation2], %s385
        // Predicated region
        $region61: #{tpu_custom_call.1} parent=59 // pred_check
          %p387 = pneg %p73
        $region62: #{tpu_custom_call.1} parent=59 // pred_check_branch
          %389 = sbr.rel (%p387) target = $region64
        $region63: #{tpu_custom_call.1} parent=59 // pred_region
          %390 = dma.done %s383, 128
        $region64: #{tpu_custom_call.1} parent=59 // pred_fallthru
          _
        // Predicated region
        $region65: #{tpu_custom_call.1} parent=59 // pred_check
          %p391 = pneg %p94
        $region66: #{tpu_custom_call.1} parent=59 // pred_check_branch
          %393 = sbr.rel (%p391) target = $region68
        $region67: #{tpu_custom_call.1} parent=59 // pred_region
          %394 = dma.done [#allocation5], 512
        $region68: #{tpu_custom_call.1} parent=59 // pred_fallthru
          _
        // Predicated region
        $region69: #{tpu_custom_call.1} parent=59 // pred_check
          %p395 = pneg %p115
        $region70: #{tpu_custom_call.1} parent=59 // pred_check_branch
          %397 = sbr.rel (%p395) target = $region72
        $region71: #{tpu_custom_call.1} parent=59 // pred_region
          %398 = dma.done [#allocation5], 64
        $region72: #{tpu_custom_call.1} parent=59 // pred_fallthru
          _
        // Predicated region
        $region73: #{tpu_custom_call.1} parent=59 // pred_check
          %p399 = pneg %p136
        $region74: #{tpu_custom_call.1} parent=59 // pred_check_branch
          %401 = sbr.rel (%p399) target = $region76
        $region75: #{tpu_custom_call.1} parent=59 // pred_region
          %402 = dma.done [#allocation8], 8192
        $region76: #{tpu_custom_call.1} parent=59 // pred_fallthru
          _
        // Predicated region
        $region77: #{tpu_custom_call.1} parent=59 // pred_check
          %p403 = pneg %p157
        $region78: #{tpu_custom_call.1} parent=59 // pred_check_branch
          %405 = sbr.rel (%p403) target = $region80
        $region79: #{tpu_custom_call.1} parent=59 // pred_region
          %406 = dma.done [#allocation8], 8192
        $region80: #{tpu_custom_call.1} parent=59 // pred_fallthru
          _
        %p407 = scmp.lt.s32.totalorder %s26, 1
        %s408 = scalar_select %p407, %s26, 1
        %s409 = smul.addr %s408, 2
        %s410 = smul.addr %s409, 4
        %s411 = scalar_lea.vmem %s0, %s410
        %p412 = pneg %p47
        %p413 = pneg %p44
        %s414 = sand.u32 %s60, 1
        %s415 = scalar_lea.sflag [#allocation3], %s414
        %s416 = sand.u32 %s60, 1
        %s417 = smul.addr %s416, 8
        %s418 = scalar_lea.vmem [#allocation2], %s417
        %p419 = pneg %p73
        %p420 = pneg %p70
        %p421 = pneg %p94
        %p422 = pneg %p91
        %p423 = pneg %p115
        %p424 = pneg %p112
        %p425 = pneg %p136
        %p426 = pneg %p133
        %p427 = pneg %p157
        %p428 = pneg %p154
        %p429 = pneg %p178
        %p430 = pneg %p175
        %p431 = pneg %p199
        %p432 = pneg %p196
        %p433 = pneg %p220
        %p434 = pneg %p217
        %p435 = pneg %p241
        %p436 = pneg %p238
        %p437 = pneg %p267
        %p438 = pneg %p264
        %p439 = scmp.lt.s32.totalorder %s26, 1
        %s440 = scalar_select %p439, %s26, 1
        %s441 = smul.addr %s440, 2
        %s442 = smul.addr %s441, 8
        %s443 = scalar_lea.vmem %s10, %s442
        %p444 = scmp.lt.s32.totalorder %s26, 1
        %s445 = scalar_select %p444, %s26, 1
        %s446 = smul.addr %s445, 2
        %s447 = smul.addr %s446, 4
        %s448 = scalar_lea.vmem %s0, %s447
        %p449 = scmp.lt.s32.totalorder %s26, 1
        %s450 = scalar_select %p449, %s26, 1
        %s451 = smul.addr %s450, 2
        %s452 = smul.addr %s451, 8
        %s453 = scalar_lea.vmem %s10, %s452
        %v455 = vld [vmem:[#allocation4] sm:$0xff]
        %v456 = vld [vmem:[#allocation4 + $0x8] sm:$0xff]
        %v457 = vld [vmem:[#allocation4 + $0x10] sm:$0x1]
        %v458 = vld [vmem:[#allocation4 + $0x18] sm:$0x1]
        %v459 = vld [vmem:[#allocation6] sm:$0xf]
        %v460 = vld [vmem:[#allocation7] sm:$0xff]
        %v461 = vld [vmem:[#allocation7 + $0x8] sm:$0xff]
        %v462 = vld [vmem:[#allocation7 + $0x10] sm:$0xff]
        %v463 = vld [vmem:[#allocation7 + $0x18] sm:$0xff]
        %v464 = vld [vmem:[#allocation7 + $0x20] sm:$0xff]
        %v465 = vld [vmem:[#allocation7 + $0x28] sm:$0xff]
        %v466 = vld [vmem:[#allocation7 + $0x30] sm:$0xff]
        %v467 = vld [vmem:[#allocation7 + $0x38] sm:$0xff]
        %v468 = vld [vmem:[#allocation7 + $0x40] sm:$0xff]
        %v469 = vld [vmem:[#allocation7 + $0x48] sm:$0xff]
        %v470 = vld [vmem:[#allocation7 + $0x50] sm:$0xff]
        %v471 = vld [vmem:[#allocation7 + $0x58] sm:$0xff]
        %v472 = vld [vmem:[#allocation7 + $0x60] sm:$0xff]
        %v473 = vld [vmem:[#allocation7 + $0x68] sm:$0xff]
        %v474 = vld [vmem:[#allocation7 + $0x70] sm:$0xff]
        %v475 = vld [vmem:[#allocation7 + $0x78] sm:$0xff]
        %v476 = vld [vmem:[#allocation7 + $0x80] sm:$0xff]
        %v477 = vld [vmem:[#allocation7 + $0x88] sm:$0xff]
        %v478 = vld [vmem:[#allocation7 + $0x90] sm:$0xff]
        %v479 = vld [vmem:[#allocation7 + $0x98] sm:$0xff]
        %v480 = vld [vmem:[#allocation7 + $0xa0] sm:$0xff]
        %v481 = vld [vmem:[#allocation7 + $0xa8] sm:$0xff]
        %v482 = vld [vmem:[#allocation7 + $0xb0] sm:$0xff]
        %v483 = vld [vmem:[#allocation7 + $0xb8] sm:$0xff]
        %v484 = vld [vmem:[#allocation7 + $0xc0] sm:$0xff]
        %v485 = vld [vmem:[#allocation7 + $0xc8] sm:$0xff]
        %v486 = vld [vmem:[#allocation7 + $0xd0] sm:$0xff]
        %v487 = vld [vmem:[#allocation7 + $0xd8] sm:$0xff]
        %v488 = vld [vmem:[#allocation7 + $0xe0] sm:$0xff]
        %v489 = vld [vmem:[#allocation7 + $0xe8] sm:$0xff]
        %v490 = vld [vmem:[#allocation7 + $0xf0] sm:$0xff]
        %v491 = vld [vmem:[#allocation7 + $0xf8] sm:$0xff]
        %v492 = vld [vmem:[#allocation7 + $0x100] sm:$0xff]
        %v493 = vld [vmem:[#allocation7 + $0x108] sm:$0xff]
        %v494 = vld [vmem:[#allocation7 + $0x110] sm:$0xff]
        %v495 = vld [vmem:[#allocation7 + $0x118] sm:$0xff]
        %v496 = vld [vmem:[#allocation7 + $0x120] sm:$0xff]
        %v497 = vld [vmem:[#allocation7 + $0x128] sm:$0xff]
        %v498 = vld [vmem:[#allocation7 + $0x130] sm:$0xff]
        %v499 = vld [vmem:[#allocation7 + $0x138] sm:$0xff]
        %v500 = vld [vmem:[#allocation7 + $0x140] sm:$0xff]
        %v501 = vld [vmem:[#allocation7 + $0x148] sm:$0xff]
        %v502 = vld [vmem:[#allocation7 + $0x150] sm:$0xff]
        %v503 = vld [vmem:[#allocation7 + $0x158] sm:$0xff]
        %v504 = vld [vmem:[#allocation7 + $0x160] sm:$0xff]
        %v505 = vld [vmem:[#allocation7 + $0x168] sm:$0xff]
        %v506 = vld [vmem:[#allocation7 + $0x170] sm:$0xff]
        %v507 = vld [vmem:[#allocation7 + $0x178] sm:$0xff]
        %v508 = vld [vmem:[#allocation7 + $0x180] sm:$0xff]
        %v509 = vld [vmem:[#allocation7 + $0x188] sm:$0xff]
        %v510 = vld [vmem:[#allocation7 + $0x190] sm:$0xff]
        %v511 = vld [vmem:[#allocation7 + $0x198] sm:$0xff]
        %v512 = vld [vmem:[#allocation7 + $0x1a0] sm:$0xff]
        %v513 = vld [vmem:[#allocation7 + $0x1a8] sm:$0xff]
        %v514 = vld [vmem:[#allocation7 + $0x1b0] sm:$0xff]
        %v515 = vld [vmem:[#allocation7 + $0x1b8] sm:$0xff]
        %v516 = vld [vmem:[#allocation7 + $0x1c0] sm:$0xff]
        %v517 = vld [vmem:[#allocation7 + $0x1c8] sm:$0xff]
        %v518 = vld [vmem:[#allocation7 + $0x1d0] sm:$0xff]
        %v519 = vld [vmem:[#allocation7 + $0x1d8] sm:$0xff]
        %v520 = vld [vmem:[#allocation7 + $0x1e0] sm:$0xff]
        %v521 = vld [vmem:[#allocation7 + $0x1e8] sm:$0xff]
        %v522 = vld [vmem:[#allocation7 + $0x1f0] sm:$0xff]
        %v523 = vld [vmem:[#allocation7 + $0x1f8] sm:$0xff]
        %v524 = vld [vmem:[#allocation9] sm:$0xff]
        %v525 = vld [vmem:[#allocation9 + $0x8] sm:$0xff]
        %v526 = vld [vmem:[#allocation9 + $0x10] sm:$0xff]
        %v527 = vld [vmem:[#allocation9 + $0x18] sm:$0xff]
        %v528 = vld [vmem:[#allocation9 + $0x20] sm:$0xff]
        %v529 = vld [vmem:[#allocation9 + $0x28] sm:$0xff]
        %v530 = vld [vmem:[#allocation9 + $0x30] sm:$0xff]
        %v531 = vld [vmem:[#allocation9 + $0x38] sm:$0xff]
        %v532 = vld [vmem:[#allocation9 + $0x40] sm:$0xff]
        %v533 = vld [vmem:[#allocation9 + $0x48] sm:$0xff]
        %v534 = vld [vmem:[#allocation9 + $0x50] sm:$0xff]
        %v535 = vld [vmem:[#allocation9 + $0x58] sm:$0xff]
        %v536 = vld [vmem:[#allocation9 + $0x60] sm:$0xff]
        %v537 = vld [vmem:[#allocation9 + $0x68] sm:$0xff]
        %v538 = vld [vmem:[#allocation9 + $0x70] sm:$0xff]
        %v539 = vld [vmem:[#allocation9 + $0x78] sm:$0xff]
        %v540 = vld [vmem:[#allocation9 + $0x80] sm:$0xff]
        %v541 = vld [vmem:[#allocation9 + $0x88] sm:$0xff]
        %v542 = vld [vmem:[#allocation9 + $0x90] sm:$0xff]
        %v543 = vld [vmem:[#allocation9 + $0x98] sm:$0xff]
        %v544 = vld [vmem:[#allocation9 + $0xa0] sm:$0xff]
        %v545 = vld [vmem:[#allocation9 + $0xa8] sm:$0xff]
        %v546 = vld [vmem:[#allocation9 + $0xb0] sm:$0xff]
        %v547 = vld [vmem:[#allocation9 + $0xb8] sm:$0xff]
        %v548 = vld [vmem:[#allocation9 + $0xc0] sm:$0xff]
        %v549 = vld [vmem:[#allocation9 + $0xc8] sm:$0xff]
        %v550 = vld [vmem:[#allocation9 + $0xd0] sm:$0xff]
        %v551 = vld [vmem:[#allocation9 + $0xd8] sm:$0xff]
        %v552 = vld [vmem:[#allocation9 + $0xe0] sm:$0xff]
        %v553 = vld [vmem:[#allocation9 + $0xe8] sm:$0xff]
        %v554 = vld [vmem:[#allocation9 + $0xf0] sm:$0xff]
        %v555 = vld [vmem:[#allocation9 + $0xf8] sm:$0xff]
        %v556 = vld [vmem:[#allocation9 + $0x100] sm:$0xff]
        %v557 = vld [vmem:[#allocation9 + $0x108] sm:$0xff]
        %v558 = vld [vmem:[#allocation9 + $0x110] sm:$0xff]
        %v559 = vld [vmem:[#allocation9 + $0x118] sm:$0xff]
        %v560 = vld [vmem:[#allocation9 + $0x120] sm:$0xff]
        %v561 = vld [vmem:[#allocation9 + $0x128] sm:$0xff]
        %v562 = vld [vmem:[#allocation9 + $0x130] sm:$0xff]
        %v563 = vld [vmem:[#allocation9 + $0x138] sm:$0xff]
        %v564 = vld [vmem:[#allocation9 + $0x140] sm:$0xff]
        %v565 = vld [vmem:[#allocation9 + $0x148] sm:$0xff]
        %v566 = vld [vmem:[#allocation9 + $0x150] sm:$0xff]
        %v567 = vld [vmem:[#allocation9 + $0x158] sm:$0xff]
        %v568 = vld [vmem:[#allocation9 + $0x160] sm:$0xff]
        %v569 = vld [vmem:[#allocation9 + $0x168] sm:$0xff]
        %v570 = vld [vmem:[#allocation9 + $0x170] sm:$0xff]
        %v571 = vld [vmem:[#allocation9 + $0x178] sm:$0xff]
        %v572 = vld [vmem:[#allocation9 + $0x180] sm:$0xff]
        %v573 = vld [vmem:[#allocation9 + $0x188] sm:$0xff]
        %v574 = vld [vmem:[#allocation9 + $0x190] sm:$0xff]
        %v575 = vld [vmem:[#allocation9 + $0x198] sm:$0xff]
        %v576 = vld [vmem:[#allocation9 + $0x1a0] sm:$0xff]
        %v577 = vld [vmem:[#allocation9 + $0x1a8] sm:$0xff]
        %v578 = vld [vmem:[#allocation9 + $0x1b0] sm:$0xff]
        %v579 = vld [vmem:[#allocation9 + $0x1b8] sm:$0xff]
        %v580 = vld [vmem:[#allocation9 + $0x1c0] sm:$0xff]
        %v581 = vld [vmem:[#allocation9 + $0x1c8] sm:$0xff]
        %v582 = vld [vmem:[#allocation9 + $0x1d0] sm:$0xff]
        %v583 = vld [vmem:[#allocation9 + $0x1d8] sm:$0xff]
        %v584 = vld [vmem:[#allocation9 + $0x1e0] sm:$0xff]
        %v585 = vld [vmem:[#allocation9 + $0x1e8] sm:$0xff]
        %v586 = vld [vmem:[#allocation9 + $0x1f0] sm:$0xff]
        %v587 = vld [vmem:[#allocation9 + $0x1f8] sm:$0xff]
        %v588 = vld [vmem:[%s6] sm:$0xf]
        %v589 = vld [vmem:[%s6 + $0x4] sm:$0xf]
        %v590 = vld [vmem:[%s7] sm:$0xff]
        %v591 = vld [vmem:[%s7 + $0x8] sm:$0xff]
        %v592 = vld [vmem:[%s8] sm:$0x3]
        %v593 = vld [vmem:[%s9] sm:$0x3]
        %v594 = vld [vmem:[%s448] sm:$0xff]
        %v595 = vld [vmem:[%s386] sm:$0xff]
        %v597 = vcombine.high %v594, %v594
        %v600 = vcombine.low %v595, %v595
        %vm602 = vcmask 1043456
        %v603 = vsel %vm602, %v594, %v600
        %v604 = vsel %vm602, %v597, %v595
        %605 = vrot.lane.b32.xlu0 %v603, 17
        %v606 = vpop.permute.xlu0 %605
        %607 = vrot.lane.b32.xlu0 %v604, 17
        %v608 = vpop.permute.xlu0 %607
        %v609 = vlaneseq
        %v610 = vand.u32 %v609, 127
        %vm611 = vcmp.lt.s32.totalorder %v610, 17
        %v612 = vsel %vm611, %v606, %v608
        %v613 = vsel %vm611, %v608, %v606
        %v614 = vlaneseq
        %v615 = vshrl.u32 %v614, 7
        %v616 = vsub.s32 0, %v615
        %v617 = vrot.slane %v455, %v616
        %v618 = vlaneseq
        %v619 = vshrl.u32 %v618, 7
        %v620 = vsub.s32 0, %v619
        %v621 = vrot.slane %v456, %v620
        %v622 = vmul.f32 %v613, %v617
        %v623 = vmul.f32 %v612, %v621
        %624 = vrot.lane.b32.xlu0 %v603, 16
        %v625 = vpop.permute.xlu0 %624
        %626 = vrot.lane.b32.xlu0 %v604, 16
        %v627 = vpop.permute.xlu0 %626
        %vm628 = vcmp.lt.s32.totalorder %v610, 16
        %v629 = vsel %vm628, %v625, %v627
        %v630 = vsel %vm628, %v627, %v625
        %v631 = vlaneseq
        %v632 = vshrl.u32 %v631, 7
        %v633 = vsub.s32 1, %v632
        %v634 = vrot.slane %v455, %v633
        %v635 = vlaneseq
        %v636 = vshrl.u32 %v635, 7
        %v637 = vsub.s32 1, %v636
        %v638 = vrot.slane %v456, %v637
        %v639 = vmul.f32 %v630, %v634
        %v640 = vmul.f32 %v629, %v638
        %641 = vrot.lane.b32.xlu0 %v603, 15
        %v642 = vpop.permute.xlu0 %641
        %643 = vrot.lane.b32.xlu0 %v604, 15
        %v644 = vpop.permute.xlu0 %643
        %vm645 = vcmp.lt.s32.totalorder %v610, 15
        %v646 = vsel %vm645, %v642, %v644
        %v647 = vsel %vm645, %v644, %v642
        %v648 = vlaneseq
        %v649 = vshrl.u32 %v648, 7
        %v650 = vsub.s32 2, %v649
        %v651 = vrot.slane %v455, %v650
        %v652 = vlaneseq
        %v653 = vshrl.u32 %v652, 7
        %v654 = vsub.s32 2, %v653
        %v655 = vrot.slane %v456, %v654
        %v656 = vmul.f32 %v647, %v651
        %v657 = vmul.f32 %v646, %v655
        %658 = vrot.lane.b32.xlu0 %v603, 1
        %v659 = vpop.permute.xlu0 %658
        %660 = vrot.lane.b32.xlu0 %v604, 1
        %v661 = vpop.permute.xlu0 %660
        %vm662 = vcmp.lt.s32.totalorder %v610, 1
        %v663 = vsel %vm662, %v659, %v661
        %v664 = vsel %vm662, %v661, %v659
        %v665 = vlaneseq
        %v666 = vshrl.u32 %v665, 7
        %v667 = vsub.s32 3, %v666
        %v668 = vrot.slane %v455, %v667
        %v669 = vlaneseq
        %v670 = vshrl.u32 %v669, 7
        %v671 = vsub.s32 3, %v670
        %v672 = vrot.slane %v456, %v671
        %v673 = vmul.f32 %v664, %v668
        %v674 = vmul.f32 %v663, %v672
        %675 = vrot.lane.b32.xlu0 %v603, 127
        %v676 = vpop.permute.xlu0 %675
        %677 = vrot.lane.b32.xlu0 %v604, 127
        %v678 = vpop.permute.xlu0 %677
        %vm679 = vcmp.lt.s32.totalorder %v610, 127
        %v680 = vsel %vm679, %v676, %v678
        %v681 = vsel %vm679, %v678, %v676
        %v682 = vlaneseq
        %v683 = vshrl.u32 %v682, 7
        %v684 = vsub.s32 5, %v683
        %v685 = vrot.slane %v455, %v684
        %v686 = vlaneseq
        %v687 = vshrl.u32 %v686, 7
        %v688 = vsub.s32 5, %v687
        %v689 = vrot.slane %v456, %v688
        %v690 = vmul.f32 %v680, %v685
        %v691 = vmul.f32 %v681, %v689
        %692 = vrot.lane.b32.xlu0 %v603, 113
        %v693 = vpop.permute.xlu0 %692
        %694 = vrot.lane.b32.xlu0 %v604, 113
        %v695 = vpop.permute.xlu0 %694
        %vm696 = vcmp.lt.s32.totalorder %v610, 113
        %v697 = vsel %vm696, %v693, %v695
        %v698 = vsel %vm696, %v695, %v693
        %v699 = vlaneseq
        %v700 = vshrl.u32 %v699, 7
        %v701 = vsub.s32 6, %v700
        %v702 = vrot.slane %v455, %v701
        %v703 = vlaneseq
        %v704 = vshrl.u32 %v703, 7
        %v705 = vsub.s32 6, %v704
        %v706 = vrot.slane %v456, %v705
        %v707 = vmul.f32 %v697, %v702
        %v708 = vmul.f32 %v698, %v706
        %709 = vrot.lane.b32.xlu0 %v603, 112
        %v710 = vpop.permute.xlu0 %709
        %711 = vrot.lane.b32.xlu0 %v604, 112
        %v712 = vpop.permute.xlu0 %711
        %vm713 = vcmp.lt.s32.totalorder %v610, 112
        %v714 = vsel %vm713, %v710, %v712
        %v715 = vsel %vm713, %v712, %v710
        %v716 = vlaneseq
        %v717 = vshrl.u32 %v716, 7
        %v718 = vsub.s32 7, %v717
        %v719 = vrot.slane %v455, %v718
        %v720 = vlaneseq
        %v721 = vshrl.u32 %v720, 7
        %v722 = vsub.s32 7, %v721
        %v723 = vrot.slane %v456, %v722
        %v724 = vmul.f32 %v714, %v719
        %v725 = vmul.f32 %v715, %v723
        %726 = vrot.lane.b32.xlu0 %v603, 111
        %v727 = vpop.permute.xlu0 %726
        %728 = vrot.lane.b32.xlu0 %v604, 111
        %v729 = vpop.permute.xlu0 %728
        %vm730 = vcmp.lt.s32.totalorder %v610, 111
        %v731 = vsel %vm730, %v727, %v729
        %v732 = vsel %vm730, %v729, %v727
        %v733 = vlaneseq
        %v734 = vshrl.u32 %v733, 7
        %v735 = vsub.s32 0, %v734
        %v736 = vrot.slane %v457, %v735
        %v737 = vlaneseq
        %v738 = vshrl.u32 %v737, 7
        %v739 = vsub.s32 0, %v738
        %v740 = vrot.slane %v458, %v739
        %v741 = vmul.f32 %v731, %v736
        %v742 = vmul.f32 %v732, %v740
        %v743 = vpack.c.bf16 %v639, %v622
        %v744 = vpack.c.bf16 %v640, %v623
        %v745 = vpack.c.bf16 %v673, %v656
        %v746 = vpack.c.bf16 %v674, %v657
        %v747 = vpack.c.bf16 %v690, %v603
        %v748 = vpack.c.bf16 %v691, %v604
        %v749 = vpack.c.bf16 %v724, %v707
        %v750 = vpack.c.bf16 %v725, %v708
        %v751 = vpack.c.bf16 %v741, %v741
        %v752 = vpack.c.bf16 %v742, %v742
        %754 = vset.pattern.permute.xlu0 0
        %755 = vperm.xlu0 %754, %v590
        %v756 = vpop.permute.xlu0 %755
        %759 = vset.pattern.permute.xlu0 0
        %760 = vperm.xlu0 %759, %v591
        %v761 = vpop.permute.xlu0 %760
        %v765 = vunpack.c.l.b16 %v588
        %v766 = vunpack.c.l.b16 %v589
        %v767 = vpack.c.b16 %v766, %v765
        %vm768 = vcmask 588800
        %v770 = vsel %vm768, %v767, 0
        %v773 = vsel %vm602, %v751, 0
        %v776 = vsel %vm602, %v752, 0
        %778 = vmatprep.subr.bf16.mxu0 0
        %779 = vmatpush1.bf16.msra.mxu0 0
        %780 = vmatprep.subr.bf16.mxu0 0
        %781 = vmatpush1.bf16.msra.mxu0 0
        %782 = vmatprep.subr.bf16.mxu0 0
        %783 = vmatpush1.bf16.msra.mxu0 0
        %784 = vmatprep.subr.bf16.mxu0 %v776
        %785 = vmatpush1.bf16.msra.mxu0 %v773
        %786 = vmatprep.subr.bf16.mxu0 %v750
        %787 = vmatpush1.bf16.msra.mxu0 %v749
        %788 = vmatprep.subr.bf16.mxu0 %v748
        %789 = vmatpush1.bf16.msra.mxu0 %v747
        %790 = vmatprep.subr.bf16.mxu0 %v746
        %791 = vmatpush1.bf16.msra.mxu0 %v745
        %792 = vmatprep.subr.bf16.mxu0 %v744
        %793 = vmatpush1.bf16.msra.mxu0 %v743
        %794 = vmatprep.subr.bf16.mxu0 0
        %795 = vmatpush2.bf16.msra.mxu0 0
        %796 = vmatprep.subr.bf16.mxu0 0
        %797 = vmatpush2.bf16.msra.mxu0 0
        %798 = vmatprep.subr.bf16.mxu0 0
        %799 = vmatpush2.bf16.msra.mxu0 0
        %800 = vmatprep.subr.bf16.mxu0 0
        %801 = vmatpush2.bf16.msra.mxu0 0
        %802 = vmatprep.subr.bf16.mxu0 0
        %803 = vmatpush2.bf16.msra.mxu0 0
        %804 = vmatprep.subr.bf16.mxu0 0
        %805 = vmatpush2.bf16.msra.mxu0 0
        %806 = vmatprep.subr.bf16.mxu0 0
        %807 = vmatpush2.bf16.msra.mxu0 0
        %808 = vmatprep.subr.bf16.mxu0 0
        %809 = vmatpush2.bf16.msra.mxu0 0
        %810 = vmatprep.mubr.bf16.mxu0 0
        %811 = vmatmul.mubr.bf16.gmra.mxu0 %v770
        %v812 = vpop.f32.mrf.mxu0
        %v813 = vadd.f32 %v756, %v812
        %v814 = vpop.f32.mrf.mxu0
        %v815 = vadd.f32 %v756, %v814
        %v816 = vpop.f32.mrf.mxu0
        %v817 = vadd.f32 %v761, %v816
        %v818 = vpop.f32.mrf.mxu0
        %v819 = vadd.f32 %v761, %v818
        %820 = vdwg.mxu0
        %vm821 = vcmp.ge.f32.partialorder %v813, 0.0
        %vm822 = vcmp.ge.f32.partialorder %v815, 0.0
        %vm823 = vcmp.ge.f32.partialorder %v817, 0.0
        %vm824 = vcmp.ge.f32.partialorder %v819, 0.0
        %v825 = vmul.f32 %v813, 0.2
        %v826 = vmul.f32 %v815, 0.2
        %v827 = vmul.f32 %v817, 0.2
        %v828 = vmul.f32 %v819, 0.2
        %v829 = vsel %vm821, %v813, %v825
        %v830 = vsel %vm822, %v815, %v826
        %v831 = vsel %vm823, %v817, %v827
        %v832 = vsel %vm824, %v819, %v828
        %833 = vrot.lane.b32.xlu0 %v829, 17
        %v834 = vpop.permute.xlu0 %833
        %835 = vrot.lane.b32.xlu0 %v831, 17
        %v836 = vpop.permute.xlu0 %835
        %837 = vrot.lane.b32.xlu0 %v830, 17
        %v838 = vpop.permute.xlu0 %837
        %839 = vrot.lane.b32.xlu0 %v832, 17
        %v840 = vpop.permute.xlu0 %839
        %v841 = vsel %vm611, %v834, %v838
        %v842 = vsel %vm611, %v836, %v840
        %v843 = vsel %vm611, %v838, %v834
        %v844 = vsel %vm611, %v840, %v836
        %v845 = vmul.f32 %v843, %v617
        %v846 = vmul.f32 %v841, %v621
        %v847 = vmul.f32 %v844, %v617
        %v848 = vmul.f32 %v842, %v621
        %849 = vrot.lane.b32.xlu0 %v829, 16
        %v850 = vpop.permute.xlu0 %849
        %851 = vrot.lane.b32.xlu0 %v831, 16
        %v852 = vpop.permute.xlu0 %851
        %853 = vrot.lane.b32.xlu0 %v830, 16
        %v854 = vpop.permute.xlu0 %853
        %855 = vrot.lane.b32.xlu0 %v832, 16
        %v856 = vpop.permute.xlu0 %855
        %v857 = vsel %vm628, %v850, %v854
        %v858 = vsel %vm628, %v852, %v856
        %v859 = vsel %vm628, %v854, %v850
        %v860 = vsel %vm628, %v856, %v852
        %v861 = vmul.f32 %v859, %v634
        %v862 = vmul.f32 %v857, %v638
        %v863 = vmul.f32 %v860, %v634
        %v864 = vmul.f32 %v858, %v638
        %865 = vrot.lane.b32.xlu0 %v829, 15
        %v866 = vpop.permute.xlu0 %865
        %867 = vrot.lane.b32.xlu0 %v831, 15
        %v868 = vpop.permute.xlu0 %867
        %869 = vrot.lane.b32.xlu0 %v830, 15
        %v870 = vpop.permute.xlu0 %869
        %871 = vrot.lane.b32.xlu0 %v832, 15
        %v872 = vpop.permute.xlu0 %871
        %v873 = vsel %vm645, %v866, %v870
        %v874 = vsel %vm645, %v868, %v872
        %v875 = vsel %vm645, %v870, %v866
        %v876 = vsel %vm645, %v872, %v868
        %v877 = vmul.f32 %v875, %v651
        %v878 = vmul.f32 %v873, %v655
        %v879 = vmul.f32 %v876, %v651
        %v880 = vmul.f32 %v874, %v655
        %881 = vrot.lane.b32.xlu0 %v829, 1
        %v882 = vpop.permute.xlu0 %881
        %883 = vrot.lane.b32.xlu0 %v831, 1
        %v884 = vpop.permute.xlu0 %883
        %885 = vrot.lane.b32.xlu0 %v830, 1
        %v886 = vpop.permute.xlu0 %885
        %887 = vrot.lane.b32.xlu0 %v832, 1
        %v888 = vpop.permute.xlu0 %887
        %v889 = vsel %vm662, %v882, %v886
        %v890 = vsel %vm662, %v884, %v888
        %v891 = vsel %vm662, %v886, %v882
        %v892 = vsel %vm662, %v888, %v884
        %v893 = vmul.f32 %v891, %v668
        %v894 = vmul.f32 %v889, %v672
        %v895 = vmul.f32 %v892, %v668
        %v896 = vmul.f32 %v890, %v672
        %897 = vrot.lane.b32.xlu0 %v829, 127
        %v898 = vpop.permute.xlu0 %897
        %899 = vrot.lane.b32.xlu0 %v831, 127
        %v900 = vpop.permute.xlu0 %899
        %901 = vrot.lane.b32.xlu0 %v830, 127
        %v902 = vpop.permute.xlu0 %901
        %903 = vrot.lane.b32.xlu0 %v832, 127
        %v904 = vpop.permute.xlu0 %903
        %v905 = vsel %vm679, %v898, %v902
        %v906 = vsel %vm679, %v900, %v904
        %v907 = vsel %vm679, %v902, %v898
        %v908 = vsel %vm679, %v904, %v900
        %v909 = vmul.f32 %v905, %v685
        %v910 = vmul.f32 %v907, %v689
        %v911 = vmul.f32 %v906, %v685
        %v912 = vmul.f32 %v908, %v689
        %913 = vrot.lane.b32.xlu0 %v829, 113
        %v914 = vpop.permute.xlu0 %913
        %915 = vrot.lane.b32.xlu0 %v831, 113
        %v916 = vpop.permute.xlu0 %915
        %917 = vrot.lane.b32.xlu0 %v830, 113
        %v918 = vpop.permute.xlu0 %917
        %919 = vrot.lane.b32.xlu0 %v832, 113
        %v920 = vpop.permute.xlu0 %919
        %v921 = vsel %vm696, %v914, %v918
        %v922 = vsel %vm696, %v916, %v920
        %v923 = vsel %vm696, %v918, %v914
        %v924 = vsel %vm696, %v920, %v916
        %v925 = vmul.f32 %v921, %v702
        %v926 = vmul.f32 %v923, %v706
        %v927 = vmul.f32 %v922, %v702
        %v928 = vmul.f32 %v924, %v706
        %929 = vrot.lane.b32.xlu0 %v829, 112
        %v930 = vpop.permute.xlu0 %929
        %931 = vrot.lane.b32.xlu0 %v831, 112
        %v932 = vpop.permute.xlu0 %931
        %933 = vrot.lane.b32.xlu0 %v830, 112
        %v934 = vpop.permute.xlu0 %933
        %935 = vrot.lane.b32.xlu0 %v832, 112
        %v936 = vpop.permute.xlu0 %935
        %v937 = vsel %vm713, %v930, %v934
        %v938 = vsel %vm713, %v932, %v936
        %v939 = vsel %vm713, %v934, %v930
        %v940 = vsel %vm713, %v936, %v932
        %v941 = vmul.f32 %v937, %v719
        %v942 = vmul.f32 %v939, %v723
        %v943 = vmul.f32 %v938, %v719
        %v944 = vmul.f32 %v940, %v723
        %945 = vrot.lane.b32.xlu0 %v829, 111
        %v946 = vpop.permute.xlu0 %945
        %947 = vrot.lane.b32.xlu0 %v831, 111
        %v948 = vpop.permute.xlu0 %947
        %949 = vrot.lane.b32.xlu0 %v830, 111
        %v950 = vpop.permute.xlu0 %949
        %951 = vrot.lane.b32.xlu0 %v832, 111
        %v952 = vpop.permute.xlu0 %951
        %v953 = vsel %vm730, %v946, %v950
        %v954 = vsel %vm730, %v948, %v952
        %v955 = vsel %vm730, %v950, %v946
        %v956 = vsel %vm730, %v952, %v948
        %v957 = vmul.f32 %v953, %v736
        %v958 = vmul.f32 %v955, %v740
        %v959 = vmul.f32 %v954, %v736
        %v960 = vmul.f32 %v956, %v740
        %v961 = vpack.c.bf16 %v847, %v845
        %v962 = vpack.c.bf16 %v848, %v846
        %v963 = vpack.c.bf16 %v863, %v861
        %v964 = vpack.c.bf16 %v864, %v862
        %v965 = vpack.c.bf16 %v879, %v877
        %v966 = vpack.c.bf16 %v880, %v878
        %v967 = vpack.c.bf16 %v895, %v893
        %v968 = vpack.c.bf16 %v896, %v894
        %v969 = vpack.c.bf16 %v831, %v829
        %v970 = vpack.c.bf16 %v832, %v830
        %v971 = vpack.c.bf16 %v911, %v909
        %v972 = vpack.c.bf16 %v912, %v910
        %v973 = vpack.c.bf16 %v927, %v925
        %v974 = vpack.c.bf16 %v928, %v926
        %v975 = vpack.c.bf16 %v943, %v941
        %v976 = vpack.c.bf16 %v944, %v942
        %v977 = vpack.c.bf16 %v959, %v957
        %v978 = vpack.c.bf16 %v960, %v958
        %980 = vset.pattern.permute.xlu0 0
        %981 = vperm.xlu0 %980, %v593
        %v982 = vpop.permute.xlu0 %981
        %v986 = vunpack.c.l.s4 1966171168
        %v987 = vunpack.c.0.s8 %v986
        %v988 = vlaneseq
        %v989 = vshrl.u32 %v988, 7
        %v990 = vsub.s32 %v987, %v989
        %v991 = vrot.slane %v592, %v990
        %v992 = vcombine.high %v991, %v991
        %v994 = vunpack.c.l.s4 1966171168
        %v995 = vunpack.c.0.s8 %v994
        %v996 = vlaneseq
        %v997 = vshrl.u32 %v996, 7
        %v998 = vsub.s32 %v995, %v997
        %v999 = vrot.slane %v991, %v998
        %v1001 = vunpack.c.l.s4 1966171168
        %v1002 = vunpack.c.0.s8 %v1001
        %v1003 = vlaneseq
        %v1004 = vshrl.u32 %v1003, 7
        %v1005 = vsub.s32 %v1002, %v1004
        %v1006 = vrot.slane %v992, %v1005
        %vm1008 = vcmask 130048
        %v1010 = vsel %vm1008, %v1006, 0
        %1012 = vmatprep.subr.bf16.mxu0 %v976
        %1013 = vmatpush1.bf16.msra.mxu0 %v975
        %1014 = vmatprep.subr.bf16.mxu0 %v974
        %1015 = vmatpush1.bf16.msra.mxu0 %v973
        %1016 = vmatprep.subr.bf16.mxu0 %v972
        %1017 = vmatpush1.bf16.msra.mxu0 %v971
        %1018 = vmatprep.subr.bf16.mxu0 %v970
        %1019 = vmatpush1.bf16.msra.mxu0 %v969
        %1020 = vmatprep.subr.bf16.mxu0 %v968
        %1021 = vmatpush1.bf16.msra.mxu0 %v967
        %1022 = vmatprep.subr.bf16.mxu0 %v966
        %1023 = vmatpush1.bf16.msra.mxu0 %v965
        %1024 = vmatprep.subr.bf16.mxu0 %v964
        %1025 = vmatpush1.bf16.msra.mxu0 %v963
        %1026 = vmatprep.subr.bf16.mxu0 %v962
        %1027 = vmatpush1.bf16.msra.mxu0 %v961
        %1028 = vmatprep.subr.bf16.mxu0 0
        %1029 = vmatpush2.bf16.msra.mxu0 0
        %1030 = vmatprep.subr.bf16.mxu0 0
        %1031 = vmatpush2.bf16.msra.mxu0 0
        %1032 = vmatprep.subr.bf16.mxu0 0
        %1033 = vmatpush2.bf16.msra.mxu0 0
        %1034 = vmatprep.subr.bf16.mxu0 0
        %1035 = vmatpush2.bf16.msra.mxu0 0
        %1036 = vmatprep.subr.bf16.mxu0 0
        %1037 = vmatpush2.bf16.msra.mxu0 0
        %1038 = vmatprep.subr.bf16.mxu0 0
        %1039 = vmatpush2.bf16.msra.mxu0 0
        %1040 = vmatprep.subr.bf16.mxu0 0
        %1041 = vmatpush2.bf16.msra.mxu0 0
        %1042 = vmatprep.subr.bf16.mxu0 %v978
        %1043 = vmatpush2.bf16.msra.mxu0 %v977
        %1044 = vmatprep.mubr.bf16.mxu0 %v1010
        %1045 = vmatmul.mubr.bf16.gmra.mxu0 %v999
        %v1046 = vpop.f32.mrf.mxu0
        %v1047 = vadd.f32 %v982, %v1046
        %v1048 = vpop.f32.mrf.mxu0
        %v1049 = vadd.f32 %v982, %v1048
        %v1050 = vpop.f32.mrf.mxu0
        %v1051 = vpop.f32.mrf.mxu0
        %1052 = vdwg.mxu0
        %v1055 = vcombine.low %v1047, %v1049
        %v1057 = vunpack.c.l.s4 1983009808
        %v1058 = vunpack.c.0.s8 %v1057
        %v1059 = vlaneseq
        %v1060 = vshrl.u32 %v1059, 7
        %v1061 = vsub.s32 %v1058, %v1060
        %v1062 = vrot.slane %v1055, %v1061
        %v1064 = vadd.f32 %v459, %v1062
        %v1066 = vlaneseq
        %v1067 = vshrl.u32 %v1066, 7
        %v1068 = vsub.s32 0, %v1067
        %v1069 = vrot.slane %v1064, %v1068
        %v1070 = vlaneseq
        %v1071 = vshrl.u32 %v1070, 7
        %v1072 = vsub.s32 2, %v1071
        %v1073 = vrot.slane %v1064, %v1072
        %v1076 = vlaneseq
        %v1077 = vshrl.u32 %v1076, 7
        %v1078 = vsub.s32 0, %v1077
        %v1079 = vrot.slane %v1069, %v1078
        %v1080 = vlaneseq
        %v1081 = vshrl.u32 %v1080, 7
        %v1082 = vsub.s32 0, %v1081
        %v1083 = vrot.slane %v1073, %v1082
        %v1084 = vsub.f32 %v460, %v1079
        %v1085 = vsub.f32 %v461, %v1083
        %v1086 = vsub.f32 %v462, %v1079
        %v1087 = vsub.f32 %v463, %v1083
        %v1088 = vsub.f32 %v464, %v1079
        %v1089 = vsub.f32 %v465, %v1083
        %v1090 = vsub.f32 %v466, %v1079
        %v1091 = vsub.f32 %v467, %v1083
        %v1092 = vsub.f32 %v468, %v1079
        %v1093 = vsub.f32 %v469, %v1083
        %v1094 = vsub.f32 %v470, %v1079
        %v1095 = vsub.f32 %v471, %v1083
        %v1096 = vsub.f32 %v472, %v1079
        %v1097 = vsub.f32 %v473, %v1083
        %v1098 = vsub.f32 %v474, %v1079
        %v1099 = vsub.f32 %v475, %v1083
        %v1100 = vsub.f32 %v476, %v1079
        %v1101 = vsub.f32 %v477, %v1083
        %v1102 = vsub.f32 %v478, %v1079
        %v1103 = vsub.f32 %v479, %v1083
        %v1104 = vsub.f32 %v480, %v1079
        %v1105 = vsub.f32 %v481, %v1083
        %v1106 = vsub.f32 %v482, %v1079
        %v1107 = vsub.f32 %v483, %v1083
        %v1108 = vsub.f32 %v484, %v1079
        %v1109 = vsub.f32 %v485, %v1083
        %v1110 = vsub.f32 %v486, %v1079
        %v1111 = vsub.f32 %v487, %v1083
        %v1112 = vsub.f32 %v488, %v1079
        %v1113 = vsub.f32 %v489, %v1083
        %v1114 = vsub.f32 %v490, %v1079
        %v1115 = vsub.f32 %v491, %v1083
        %v1116 = vsub.f32 %v492, %v1079
        %v1117 = vsub.f32 %v493, %v1083
        %v1118 = vsub.f32 %v494, %v1079
        %v1119 = vsub.f32 %v495, %v1083
        %v1120 = vsub.f32 %v496, %v1079
        %v1121 = vsub.f32 %v497, %v1083
        %v1122 = vsub.f32 %v498, %v1079
        %v1123 = vsub.f32 %v499, %v1083
        %v1124 = vsub.f32 %v500, %v1079
        %v1125 = vsub.f32 %v501, %v1083
        %v1126 = vsub.f32 %v502, %v1079
        %v1127 = vsub.f32 %v503, %v1083
        %v1128 = vsub.f32 %v504, %v1079
        %v1129 = vsub.f32 %v505, %v1083
        %v1130 = vsub.f32 %v506, %v1079
        %v1131 = vsub.f32 %v507, %v1083
        %v1132 = vsub.f32 %v508, %v1079
        %v1133 = vsub.f32 %v509, %v1083
        %v1134 = vsub.f32 %v510, %v1079
        %v1135 = vsub.f32 %v511, %v1083
        %v1136 = vsub.f32 %v512, %v1079
        %v1137 = vsub.f32 %v513, %v1083
        %v1138 = vsub.f32 %v514, %v1079
        %v1139 = vsub.f32 %v515, %v1083
        %v1140 = vsub.f32 %v516, %v1079
        %v1141 = vsub.f32 %v517, %v1083
        %v1142 = vsub.f32 %v518, %v1079
        %v1143 = vsub.f32 %v519, %v1083
        %v1144 = vsub.f32 %v520, %v1079
        %v1145 = vsub.f32 %v521, %v1083
        %v1146 = vsub.f32 %v522, %v1079
        %v1147 = vsub.f32 %v523, %v1083
        %v1148 = vand.u32 2147483647, %v1084
        %v1149 = vand.u32 2147483647, %v1085
        %v1150 = vand.u32 2147483647, %v1086
        %v1151 = vand.u32 2147483647, %v1087
        %v1152 = vand.u32 2147483647, %v1088
        %v1153 = vand.u32 2147483647, %v1089
        %v1154 = vand.u32 2147483647, %v1090
        %v1155 = vand.u32 2147483647, %v1091
        %v1156 = vand.u32 2147483647, %v1092
        %v1157 = vand.u32 2147483647, %v1093
        %v1158 = vand.u32 2147483647, %v1094
        %v1159 = vand.u32 2147483647, %v1095
        %v1160 = vand.u32 2147483647, %v1096
        %v1161 = vand.u32 2147483647, %v1097
        %v1162 = vand.u32 2147483647, %v1098
        %v1163 = vand.u32 2147483647, %v1099
        %v1164 = vand.u32 2147483647, %v1100
        %v1165 = vand.u32 2147483647, %v1101
        %v1166 = vand.u32 2147483647, %v1102
        %v1167 = vand.u32 2147483647, %v1103
        %v1168 = vand.u32 2147483647, %v1104
        %v1169 = vand.u32 2147483647, %v1105
        %v1170 = vand.u32 2147483647, %v1106
        %v1171 = vand.u32 2147483647, %v1107
        %v1172 = vand.u32 2147483647, %v1108
        %v1173 = vand.u32 2147483647, %v1109
        %v1174 = vand.u32 2147483647, %v1110
        %v1175 = vand.u32 2147483647, %v1111
        %v1176 = vand.u32 2147483647, %v1112
        %v1177 = vand.u32 2147483647, %v1113
        %v1178 = vand.u32 2147483647, %v1114
        %v1179 = vand.u32 2147483647, %v1115
        %v1180 = vand.u32 2147483647, %v1116
        %v1181 = vand.u32 2147483647, %v1117
        %v1182 = vand.u32 2147483647, %v1118
        %v1183 = vand.u32 2147483647, %v1119
        %v1184 = vand.u32 2147483647, %v1120
        %v1185 = vand.u32 2147483647, %v1121
        %v1186 = vand.u32 2147483647, %v1122
        %v1187 = vand.u32 2147483647, %v1123
        %v1188 = vand.u32 2147483647, %v1124
        %v1189 = vand.u32 2147483647, %v1125
        %v1190 = vand.u32 2147483647, %v1126
        %v1191 = vand.u32 2147483647, %v1127
        %v1192 = vand.u32 2147483647, %v1128
        %v1193 = vand.u32 2147483647, %v1129
        %v1194 = vand.u32 2147483647, %v1130
        %v1195 = vand.u32 2147483647, %v1131
        %v1196 = vand.u32 2147483647, %v1132
        %v1197 = vand.u32 2147483647, %v1133
        %v1198 = vand.u32 2147483647, %v1134
        %v1199 = vand.u32 2147483647, %v1135
        %v1200 = vand.u32 2147483647, %v1136
        %v1201 = vand.u32 2147483647, %v1137
        %v1202 = vand.u32 2147483647, %v1138
        %v1203 = vand.u32 2147483647, %v1139
        %v1204 = vand.u32 2147483647, %v1140
        %v1205 = vand.u32 2147483647, %v1141
        %v1206 = vand.u32 2147483647, %v1142
        %v1207 = vand.u32 2147483647, %v1143
        %v1208 = vand.u32 2147483647, %v1144
        %v1209 = vand.u32 2147483647, %v1145
        %v1210 = vand.u32 2147483647, %v1146
        %v1211 = vand.u32 2147483647, %v1147
        %v1212 = vsub.f32 1.0, %v1148
        %v1213 = vsub.f32 1.0, %v1149
        %v1214 = vsub.f32 1.0, %v1150
        %v1215 = vsub.f32 1.0, %v1151
        %v1216 = vsub.f32 1.0, %v1152
        %v1217 = vsub.f32 1.0, %v1153
        %v1218 = vsub.f32 1.0, %v1154
        %v1219 = vsub.f32 1.0, %v1155
        %v1220 = vsub.f32 1.0, %v1156
        %v1221 = vsub.f32 1.0, %v1157
        %v1222 = vsub.f32 1.0, %v1158
        %v1223 = vsub.f32 1.0, %v1159
        %v1224 = vsub.f32 1.0, %v1160
        %v1225 = vsub.f32 1.0, %v1161
        %v1226 = vsub.f32 1.0, %v1162
        %v1227 = vsub.f32 1.0, %v1163
        %v1228 = vsub.f32 1.0, %v1164
        %v1229 = vsub.f32 1.0, %v1165
        %v1230 = vsub.f32 1.0, %v1166
        %v1231 = vsub.f32 1.0, %v1167
        %v1232 = vsub.f32 1.0, %v1168
        %v1233 = vsub.f32 1.0, %v1169
        %v1234 = vsub.f32 1.0, %v1170
        %v1235 = vsub.f32 1.0, %v1171
        %v1236 = vsub.f32 1.0, %v1172
        %v1237 = vsub.f32 1.0, %v1173
        %v1238 = vsub.f32 1.0, %v1174
        %v1239 = vsub.f32 1.0, %v1175
        %v1240 = vsub.f32 1.0, %v1176
        %v1241 = vsub.f32 1.0, %v1177
        %v1242 = vsub.f32 1.0, %v1178
        %v1243 = vsub.f32 1.0, %v1179
        %v1244 = vsub.f32 1.0, %v1180
        %v1245 = vsub.f32 1.0, %v1181
        %v1246 = vsub.f32 1.0, %v1182
        %v1247 = vsub.f32 1.0, %v1183
        %v1248 = vsub.f32 1.0, %v1184
        %v1249 = vsub.f32 1.0, %v1185
        %v1250 = vsub.f32 1.0, %v1186
        %v1251 = vsub.f32 1.0, %v1187
        %v1252 = vsub.f32 1.0, %v1188
        %v1253 = vsub.f32 1.0, %v1189
        %v1254 = vsub.f32 1.0, %v1190
        %v1255 = vsub.f32 1.0, %v1191
        %v1256 = vsub.f32 1.0, %v1192
        %v1257 = vsub.f32 1.0, %v1193
        %v1258 = vsub.f32 1.0, %v1194
        %v1259 = vsub.f32 1.0, %v1195
        %v1260 = vsub.f32 1.0, %v1196
        %v1261 = vsub.f32 1.0, %v1197
        %v1262 = vsub.f32 1.0, %v1198
        %v1263 = vsub.f32 1.0, %v1199
        %v1264 = vsub.f32 1.0, %v1200
        %v1265 = vsub.f32 1.0, %v1201
        %v1266 = vsub.f32 1.0, %v1202
        %v1267 = vsub.f32 1.0, %v1203
        %v1268 = vsub.f32 1.0, %v1204
        %v1269 = vsub.f32 1.0, %v1205
        %v1270 = vsub.f32 1.0, %v1206
        %v1271 = vsub.f32 1.0, %v1207
        %v1272 = vsub.f32 1.0, %v1208
        %v1273 = vsub.f32 1.0, %v1209
        %v1274 = vsub.f32 1.0, %v1210
        %v1275 = vsub.f32 1.0, %v1211
        %v1276 = vmax.f32 %v1212, 0.0
        %v1277 = vmax.f32 %v1213, 0.0
        %v1278 = vmax.f32 %v1214, 0.0
        %v1279 = vmax.f32 %v1215, 0.0
        %v1280 = vmax.f32 %v1216, 0.0
        %v1281 = vmax.f32 %v1217, 0.0
        %v1282 = vmax.f32 %v1218, 0.0
        %v1283 = vmax.f32 %v1219, 0.0
        %v1284 = vmax.f32 %v1220, 0.0
        %v1285 = vmax.f32 %v1221, 0.0
        %v1286 = vmax.f32 %v1222, 0.0
        %v1287 = vmax.f32 %v1223, 0.0
        %v1288 = vmax.f32 %v1224, 0.0
        %v1289 = vmax.f32 %v1225, 0.0
        %v1290 = vmax.f32 %v1226, 0.0
        %v1291 = vmax.f32 %v1227, 0.0
        %v1292 = vmax.f32 %v1228, 0.0
        %v1293 = vmax.f32 %v1229, 0.0
        %v1294 = vmax.f32 %v1230, 0.0
        %v1295 = vmax.f32 %v1231, 0.0
        %v1296 = vmax.f32 %v1232, 0.0
        %v1297 = vmax.f32 %v1233, 0.0
        %v1298 = vmax.f32 %v1234, 0.0
        %v1299 = vmax.f32 %v1235, 0.0
        %v1300 = vmax.f32 %v1236, 0.0
        %v1301 = vmax.f32 %v1237, 0.0
        %v1302 = vmax.f32 %v1238, 0.0
        %v1303 = vmax.f32 %v1239, 0.0
        %v1304 = vmax.f32 %v1240, 0.0
        %v1305 = vmax.f32 %v1241, 0.0
        %v1306 = vmax.f32 %v1242, 0.0
        %v1307 = vmax.f32 %v1243, 0.0
        %v1308 = vmax.f32 %v1244, 0.0
        %v1309 = vmax.f32 %v1245, 0.0
        %v1310 = vmax.f32 %v1246, 0.0
        %v1311 = vmax.f32 %v1247, 0.0
        %v1312 = vmax.f32 %v1248, 0.0
        %v1313 = vmax.f32 %v1249, 0.0
        %v1314 = vmax.f32 %v1250, 0.0
        %v1315 = vmax.f32 %v1251, 0.0
        %v1316 = vmax.f32 %v1252, 0.0
        %v1317 = vmax.f32 %v1253, 0.0
        %v1318 = vmax.f32 %v1254, 0.0
        %v1319 = vmax.f32 %v1255, 0.0
        %v1320 = vmax.f32 %v1256, 0.0
        %v1321 = vmax.f32 %v1257, 0.0
        %v1322 = vmax.f32 %v1258, 0.0
        %v1323 = vmax.f32 %v1259, 0.0
        %v1324 = vmax.f32 %v1260, 0.0
        %v1325 = vmax.f32 %v1261, 0.0
        %v1326 = vmax.f32 %v1262, 0.0
        %v1327 = vmax.f32 %v1263, 0.0
        %v1328 = vmax.f32 %v1264, 0.0
        %v1329 = vmax.f32 %v1265, 0.0
        %v1330 = vmax.f32 %v1266, 0.0
        %v1331 = vmax.f32 %v1267, 0.0
        %v1332 = vmax.f32 %v1268, 0.0
        %v1333 = vmax.f32 %v1269, 0.0
        %v1334 = vmax.f32 %v1270, 0.0
        %v1335 = vmax.f32 %v1271, 0.0
        %v1336 = vmax.f32 %v1272, 0.0
        %v1337 = vmax.f32 %v1273, 0.0
        %v1338 = vmax.f32 %v1274, 0.0
        %v1339 = vmax.f32 %v1275, 0.0
        %v1340 = vlaneseq
        %v1341 = vshrl.u32 %v1340, 7
        %v1342 = vsub.s32 1, %v1341
        %v1343 = vrot.slane %v1064, %v1342
        %v1344 = vlaneseq
        %v1345 = vshrl.u32 %v1344, 7
        %v1346 = vsub.s32 3, %v1345
        %v1347 = vrot.slane %v1064, %v1346
        %v1350 = vlaneseq
        %v1351 = vshrl.u32 %v1350, 7
        %v1352 = vsub.s32 1, %v1351
        %v1353 = vrot.slane %v1343, %v1352
        %v1354 = vlaneseq
        %v1355 = vshrl.u32 %v1354, 7
        %v1356 = vsub.s32 1, %v1355
        %v1357 = vrot.slane %v1347, %v1356
        %v1358 = vsub.f32 %v524, %v1353
        %v1359 = vsub.f32 %v525, %v1357
        %v1360 = vsub.f32 %v526, %v1353
        %v1361 = vsub.f32 %v527, %v1357
        %v1362 = vsub.f32 %v528, %v1353
        %v1363 = vsub.f32 %v529, %v1357
        %v1364 = vsub.f32 %v530, %v1353
        %v1365 = vsub.f32 %v531, %v1357
        %v1366 = vsub.f32 %v532, %v1353
        %v1367 = vsub.f32 %v533, %v1357
        %v1368 = vsub.f32 %v534, %v1353
        %v1369 = vsub.f32 %v535, %v1357
        %v1370 = vsub.f32 %v536, %v1353
        %v1371 = vsub.f32 %v537, %v1357
        %v1372 = vsub.f32 %v538, %v1353
        %v1373 = vsub.f32 %v539, %v1357
        %v1374 = vsub.f32 %v540, %v1353
        %v1375 = vsub.f32 %v541, %v1357
        %v1376 = vsub.f32 %v542, %v1353
        %v1377 = vsub.f32 %v543, %v1357
        %v1378 = vsub.f32 %v544, %v1353
        %v1379 = vsub.f32 %v545, %v1357
        %v1380 = vsub.f32 %v546, %v1353
        %v1381 = vsub.f32 %v547, %v1357
        %v1382 = vsub.f32 %v548, %v1353
        %v1383 = vsub.f32 %v549, %v1357
        %v1384 = vsub.f32 %v550, %v1353
        %v1385 = vsub.f32 %v551, %v1357
        %v1386 = vsub.f32 %v552, %v1353
        %v1387 = vsub.f32 %v553, %v1357
        %v1388 = vsub.f32 %v554, %v1353
        %v1389 = vsub.f32 %v555, %v1357
        %v1390 = vsub.f32 %v556, %v1353
        %v1391 = vsub.f32 %v557, %v1357
        %v1392 = vsub.f32 %v558, %v1353
        %v1393 = vsub.f32 %v559, %v1357
        %v1394 = vsub.f32 %v560, %v1353
        %v1395 = vsub.f32 %v561, %v1357
        %v1396 = vsub.f32 %v562, %v1353
        %v1397 = vsub.f32 %v563, %v1357
        %v1398 = vsub.f32 %v564, %v1353
        %v1399 = vsub.f32 %v565, %v1357
        %v1400 = vsub.f32 %v566, %v1353
        %v1401 = vsub.f32 %v567, %v1357
        %v1402 = vsub.f32 %v568, %v1353
        %v1403 = vsub.f32 %v569, %v1357
        %v1404 = vsub.f32 %v570, %v1353
        %v1405 = vsub.f32 %v571, %v1357
        %v1406 = vsub.f32 %v572, %v1353
        %v1407 = vsub.f32 %v573, %v1357
        %v1408 = vsub.f32 %v574, %v1353
        %v1409 = vsub.f32 %v575, %v1357
        %v1410 = vsub.f32 %v576, %v1353
        %v1411 = vsub.f32 %v577, %v1357
        %v1412 = vsub.f32 %v578, %v1353
        %v1413 = vsub.f32 %v579, %v1357
        %v1414 = vsub.f32 %v580, %v1353
        %v1415 = vsub.f32 %v581, %v1357
        %v1416 = vsub.f32 %v582, %v1353
        %v1417 = vsub.f32 %v583, %v1357
        %v1418 = vsub.f32 %v584, %v1353
        %v1419 = vsub.f32 %v585, %v1357
        %v1420 = vsub.f32 %v586, %v1353
        %v1421 = vsub.f32 %v587, %v1357
        %v1422 = vand.u32 2147483647, %v1358
        %v1423 = vand.u32 2147483647, %v1359
        %v1424 = vand.u32 2147483647, %v1360
        %v1425 = vand.u32 2147483647, %v1361
        %v1426 = vand.u32 2147483647, %v1362
        %v1427 = vand.u32 2147483647, %v1363
        %v1428 = vand.u32 2147483647, %v1364
        %v1429 = vand.u32 2147483647, %v1365
        %v1430 = vand.u32 2147483647, %v1366
        %v1431 = vand.u32 2147483647, %v1367
        %v1432 = vand.u32 2147483647, %v1368
        %v1433 = vand.u32 2147483647, %v1369
        %v1434 = vand.u32 2147483647, %v1370
        %v1435 = vand.u32 2147483647, %v1371
        %v1436 = vand.u32 2147483647, %v1372
        %v1437 = vand.u32 2147483647, %v1373
        %v1438 = vand.u32 2147483647, %v1374
        %v1439 = vand.u32 2147483647, %v1375
        %v1440 = vand.u32 2147483647, %v1376
        %v1441 = vand.u32 2147483647, %v1377
        %v1442 = vand.u32 2147483647, %v1378
        %v1443 = vand.u32 2147483647, %v1379
        %v1444 = vand.u32 2147483647, %v1380
        %v1445 = vand.u32 2147483647, %v1381
        %v1446 = vand.u32 2147483647, %v1382
        %v1447 = vand.u32 2147483647, %v1383
        %v1448 = vand.u32 2147483647, %v1384
        %v1449 = vand.u32 2147483647, %v1385
        %v1450 = vand.u32 2147483647, %v1386
        %v1451 = vand.u32 2147483647, %v1387
        %v1452 = vand.u32 2147483647, %v1388
        %v1453 = vand.u32 2147483647, %v1389
        %v1454 = vand.u32 2147483647, %v1390
        %v1455 = vand.u32 2147483647, %v1391
        %v1456 = vand.u32 2147483647, %v1392
        %v1457 = vand.u32 2147483647, %v1393
        %v1458 = vand.u32 2147483647, %v1394
        %v1459 = vand.u32 2147483647, %v1395
        %v1460 = vand.u32 2147483647, %v1396
        %v1461 = vand.u32 2147483647, %v1397
        %v1462 = vand.u32 2147483647, %v1398
        %v1463 = vand.u32 2147483647, %v1399
        %v1464 = vand.u32 2147483647, %v1400
        %v1465 = vand.u32 2147483647, %v1401
        %v1466 = vand.u32 2147483647, %v1402
        %v1467 = vand.u32 2147483647, %v1403
        %v1468 = vand.u32 2147483647, %v1404
        %v1469 = vand.u32 2147483647, %v1405
        %v1470 = vand.u32 2147483647, %v1406
        %v1471 = vand.u32 2147483647, %v1407
        %v1472 = vand.u32 2147483647, %v1408
        %v1473 = vand.u32 2147483647, %v1409
        %v1474 = vand.u32 2147483647, %v1410
        %v1475 = vand.u32 2147483647, %v1411
        %v1476 = vand.u32 2147483647, %v1412
        %v1477 = vand.u32 2147483647, %v1413
        %v1478 = vand.u32 2147483647, %v1414
        %v1479 = vand.u32 2147483647, %v1415
        %v1480 = vand.u32 2147483647, %v1416
        %v1481 = vand.u32 2147483647, %v1417
        %v1482 = vand.u32 2147483647, %v1418
        %v1483 = vand.u32 2147483647, %v1419
        %v1484 = vand.u32 2147483647, %v1420
        %v1485 = vand.u32 2147483647, %v1421
        %v1486 = vsub.f32 1.0, %v1422
        %v1487 = vsub.f32 1.0, %v1423
        %v1488 = vsub.f32 1.0, %v1424
        %v1489 = vsub.f32 1.0, %v1425
        %v1490 = vsub.f32 1.0, %v1426
        %v1491 = vsub.f32 1.0, %v1427
        %v1492 = vsub.f32 1.0, %v1428
        %v1493 = vsub.f32 1.0, %v1429
        %v1494 = vsub.f32 1.0, %v1430
        %v1495 = vsub.f32 1.0, %v1431
        %v1496 = vsub.f32 1.0, %v1432
        %v1497 = vsub.f32 1.0, %v1433
        %v1498 = vsub.f32 1.0, %v1434
        %v1499 = vsub.f32 1.0, %v1435
        %v1500 = vsub.f32 1.0, %v1436
        %v1501 = vsub.f32 1.0, %v1437
        %v1502 = vsub.f32 1.0, %v1438
        %v1503 = vsub.f32 1.0, %v1439
        %v1504 = vsub.f32 1.0, %v1440
        %v1505 = vsub.f32 1.0, %v1441
        %v1506 = vsub.f32 1.0, %v1442
        %v1507 = vsub.f32 1.0, %v1443
        %v1508 = vsub.f32 1.0, %v1444
        %v1509 = vsub.f32 1.0, %v1445
        %v1510 = vsub.f32 1.0, %v1446
        %v1511 = vsub.f32 1.0, %v1447
        %v1512 = vsub.f32 1.0, %v1448
        %v1513 = vsub.f32 1.0, %v1449
        %v1514 = vsub.f32 1.0, %v1450
        %v1515 = vsub.f32 1.0, %v1451
        %v1516 = vsub.f32 1.0, %v1452
        %v1517 = vsub.f32 1.0, %v1453
        %v1518 = vsub.f32 1.0, %v1454
        %v1519 = vsub.f32 1.0, %v1455
        %v1520 = vsub.f32 1.0, %v1456
        %v1521 = vsub.f32 1.0, %v1457
        %v1522 = vsub.f32 1.0, %v1458
        %v1523 = vsub.f32 1.0, %v1459
        %v1524 = vsub.f32 1.0, %v1460
        %v1525 = vsub.f32 1.0, %v1461
        %v1526 = vsub.f32 1.0, %v1462
        %v1527 = vsub.f32 1.0, %v1463
        %v1528 = vsub.f32 1.0, %v1464
        %v1529 = vsub.f32 1.0, %v1465
        %v1530 = vsub.f32 1.0, %v1466
        %v1531 = vsub.f32 1.0, %v1467
        %v1532 = vsub.f32 1.0, %v1468
        %v1533 = vsub.f32 1.0, %v1469
        %v1534 = vsub.f32 1.0, %v1470
        %v1535 = vsub.f32 1.0, %v1471
        %v1536 = vsub.f32 1.0, %v1472
        %v1537 = vsub.f32 1.0, %v1473
        %v1538 = vsub.f32 1.0, %v1474
        %v1539 = vsub.f32 1.0, %v1475
        %v1540 = vsub.f32 1.0, %v1476
        %v1541 = vsub.f32 1.0, %v1477
        %v1542 = vsub.f32 1.0, %v1478
        %v1543 = vsub.f32 1.0, %v1479
        %v1544 = vsub.f32 1.0, %v1480
        %v1545 = vsub.f32 1.0, %v1481
        %v1546 = vsub.f32 1.0, %v1482
        %v1547 = vsub.f32 1.0, %v1483
        %v1548 = vsub.f32 1.0, %v1484
        %v1549 = vsub.f32 1.0, %v1485
        %v1550 = vmax.f32 %v1486, 0.0
        %v1551 = vmax.f32 %v1487, 0.0
        %v1552 = vmax.f32 %v1488, 0.0
        %v1553 = vmax.f32 %v1489, 0.0
        %v1554 = vmax.f32 %v1490, 0.0
        %v1555 = vmax.f32 %v1491, 0.0
        %v1556 = vmax.f32 %v1492, 0.0
        %v1557 = vmax.f32 %v1493, 0.0
        %v1558 = vmax.f32 %v1494, 0.0
        %v1559 = vmax.f32 %v1495, 0.0
        %v1560 = vmax.f32 %v1496, 0.0
        %v1561 = vmax.f32 %v1497, 0.0
        %v1562 = vmax.f32 %v1498, 0.0
        %v1563 = vmax.f32 %v1499, 0.0
        %v1564 = vmax.f32 %v1500, 0.0
        %v1565 = vmax.f32 %v1501, 0.0
        %v1566 = vmax.f32 %v1502, 0.0
        %v1567 = vmax.f32 %v1503, 0.0
        %v1568 = vmax.f32 %v1504, 0.0
        %v1569 = vmax.f32 %v1505, 0.0
        %v1570 = vmax.f32 %v1506, 0.0
        %v1571 = vmax.f32 %v1507, 0.0
        %v1572 = vmax.f32 %v1508, 0.0
        %v1573 = vmax.f32 %v1509, 0.0
        %v1574 = vmax.f32 %v1510, 0.0
        %v1575 = vmax.f32 %v1511, 0.0
        %v1576 = vmax.f32 %v1512, 0.0
        %v1577 = vmax.f32 %v1513, 0.0
        %v1578 = vmax.f32 %v1514, 0.0
        %v1579 = vmax.f32 %v1515, 0.0
        %v1580 = vmax.f32 %v1516, 0.0
        %v1581 = vmax.f32 %v1517, 0.0
        %v1582 = vmax.f32 %v1518, 0.0
        %v1583 = vmax.f32 %v1519, 0.0
        %v1584 = vmax.f32 %v1520, 0.0
        %v1585 = vmax.f32 %v1521, 0.0
        %v1586 = vmax.f32 %v1522, 0.0
        %v1587 = vmax.f32 %v1523, 0.0
        %v1588 = vmax.f32 %v1524, 0.0
        %v1589 = vmax.f32 %v1525, 0.0
        %v1590 = vmax.f32 %v1526, 0.0
        %v1591 = vmax.f32 %v1527, 0.0
        %v1592 = vmax.f32 %v1528, 0.0
        %v1593 = vmax.f32 %v1529, 0.0
        %v1594 = vmax.f32 %v1530, 0.0
        %v1595 = vmax.f32 %v1531, 0.0
        %v1596 = vmax.f32 %v1532, 0.0
        %v1597 = vmax.f32 %v1533, 0.0
        %v1598 = vmax.f32 %v1534, 0.0
        %v1599 = vmax.f32 %v1535, 0.0
        %v1600 = vmax.f32 %v1536, 0.0
        %v1601 = vmax.f32 %v1537, 0.0
        %v1602 = vmax.f32 %v1538, 0.0
        %v1603 = vmax.f32 %v1539, 0.0
        %v1604 = vmax.f32 %v1540, 0.0
        %v1605 = vmax.f32 %v1541, 0.0
        %v1606 = vmax.f32 %v1542, 0.0
        %v1607 = vmax.f32 %v1543, 0.0
        %v1608 = vmax.f32 %v1544, 0.0
        %v1609 = vmax.f32 %v1545, 0.0
        %v1610 = vmax.f32 %v1546, 0.0
        %v1611 = vmax.f32 %v1547, 0.0
        %v1612 = vmax.f32 %v1548, 0.0
        %v1613 = vmax.f32 %v1549, 0.0
        %v1614 = vmul.f32 %v1276, %v1550
        %v1615 = vmul.f32 %v1277, %v1551
        %v1616 = vmul.f32 %v1278, %v1552
        %v1617 = vmul.f32 %v1279, %v1553
        %v1618 = vmul.f32 %v1280, %v1554
        %v1619 = vmul.f32 %v1281, %v1555
        %v1620 = vmul.f32 %v1282, %v1556
        %v1621 = vmul.f32 %v1283, %v1557
        %v1622 = vmul.f32 %v1284, %v1558
        %v1623 = vmul.f32 %v1285, %v1559
        %v1624 = vmul.f32 %v1286, %v1560
        %v1625 = vmul.f32 %v1287, %v1561
        %v1626 = vmul.f32 %v1288, %v1562
        %v1627 = vmul.f32 %v1289, %v1563
        %v1628 = vmul.f32 %v1290, %v1564
        %v1629 = vmul.f32 %v1291, %v1565
        %v1630 = vmul.f32 %v1292, %v1566
        %v1631 = vmul.f32 %v1293, %v1567
        %v1632 = vmul.f32 %v1294, %v1568
        %v1633 = vmul.f32 %v1295, %v1569
        %v1634 = vmul.f32 %v1296, %v1570
        %v1635 = vmul.f32 %v1297, %v1571
        %v1636 = vmul.f32 %v1298, %v1572
        %v1637 = vmul.f32 %v1299, %v1573
        %v1638 = vmul.f32 %v1300, %v1574
        %v1639 = vmul.f32 %v1301, %v1575
        %v1640 = vmul.f32 %v1302, %v1576
        %v1641 = vmul.f32 %v1303, %v1577
        %v1642 = vmul.f32 %v1304, %v1578
        %v1643 = vmul.f32 %v1305, %v1579
        %v1644 = vmul.f32 %v1306, %v1580
        %v1645 = vmul.f32 %v1307, %v1581
        %v1646 = vmul.f32 %v1308, %v1582
        %v1647 = vmul.f32 %v1309, %v1583
        %v1648 = vmul.f32 %v1310, %v1584
        %v1649 = vmul.f32 %v1311, %v1585
        %v1650 = vmul.f32 %v1312, %v1586
        %v1651 = vmul.f32 %v1313, %v1587
        %v1652 = vmul.f32 %v1314, %v1588
        %v1653 = vmul.f32 %v1315, %v1589
        %v1654 = vmul.f32 %v1316, %v1590
        %v1655 = vmul.f32 %v1317, %v1591
        %v1656 = vmul.f32 %v1318, %v1592
        %v1657 = vmul.f32 %v1319, %v1593
        %v1658 = vmul.f32 %v1320, %v1594
        %v1659 = vmul.f32 %v1321, %v1595
        %v1660 = vmul.f32 %v1322, %v1596
        %v1661 = vmul.f32 %v1323, %v1597
        %v1662 = vmul.f32 %v1324, %v1598
        %v1663 = vmul.f32 %v1325, %v1599
        %v1664 = vmul.f32 %v1326, %v1600
        %v1665 = vmul.f32 %v1327, %v1601
        %v1666 = vmul.f32 %v1328, %v1602
        %v1667 = vmul.f32 %v1329, %v1603
        %v1668 = vmul.f32 %v1330, %v1604
        %v1669 = vmul.f32 %v1331, %v1605
        %v1670 = vmul.f32 %v1332, %v1606
        %v1671 = vmul.f32 %v1333, %v1607
        %v1672 = vmul.f32 %v1334, %v1608
        %v1673 = vmul.f32 %v1335, %v1609
        %v1674 = vmul.f32 %v1336, %v1610
        %v1675 = vmul.f32 %v1337, %v1611
        %v1676 = vmul.f32 %v1338, %v1612
        %v1677 = vmul.f32 %v1339, %v1613
        %v1678 = vpack.c.bf16 %v1616, %v1614
        %v1679 = vpack.c.bf16 %v1617, %v1615
        %v1680 = vpack.c.bf16 %v1620, %v1618
        %v1681 = vpack.c.bf16 %v1621, %v1619
        %v1682 = vpack.c.bf16 %v1624, %v1622
        %v1683 = vpack.c.bf16 %v1625, %v1623
        %v1684 = vpack.c.bf16 %v1628, %v1626
        %v1685 = vpack.c.bf16 %v1629, %v1627
        %v1686 = vpack.c.bf16 %v1632, %v1630
        %v1687 = vpack.c.bf16 %v1633, %v1631
        %v1688 = vpack.c.bf16 %v1636, %v1634
        %v1689 = vpack.c.bf16 %v1637, %v1635
        %v1690 = vpack.c.bf16 %v1640, %v1638
        %v1691 = vpack.c.bf16 %v1641, %v1639
        %v1692 = vpack.c.bf16 %v1644, %v1642
        %v1693 = vpack.c.bf16 %v1645, %v1643
        %v1694 = vpack.c.bf16 %v1648, %v1646
        %v1695 = vpack.c.bf16 %v1649, %v1647
        %v1696 = vpack.c.bf16 %v1652, %v1650
        %v1697 = vpack.c.bf16 %v1653, %v1651
        %v1698 = vpack.c.bf16 %v1656, %v1654
        %v1699 = vpack.c.bf16 %v1657, %v1655
        %v1700 = vpack.c.bf16 %v1660, %v1658
        %v1701 = vpack.c.bf16 %v1661, %v1659
        %v1702 = vpack.c.bf16 %v1664, %v1662
        %v1703 = vpack.c.bf16 %v1665, %v1663
        %v1704 = vpack.c.bf16 %v1668, %v1666
        %v1705 = vpack.c.bf16 %v1669, %v1667
        %v1706 = vpack.c.bf16 %v1672, %v1670
        %v1707 = vpack.c.bf16 %v1673, %v1671
        %v1708 = vpack.c.bf16 %v1676, %v1674
        %v1709 = vpack.c.bf16 %v1677, %v1675
        %v1710 = vcombine.high %v595, %v595
        %v1712 = vpack.c.bf16 %v595, %v595
        %v1713 = vpack.c.bf16 %v1710, %v1710
        %1714 = vmatprep.subr.bf16.mxu0 %v1693
        %1715 = vmatpush1.bf16.msra.mxu0 %v1692
        %1716 = vmatprep.subr.bf16.mxu0 %v1691
        %1717 = vmatpush1.bf16.msra.mxu0 %v1690
        %1718 = vmatprep.subr.bf16.mxu0 %v1689
        %1719 = vmatpush1.bf16.msra.mxu0 %v1688
        %1720 = vmatprep.subr.bf16.mxu0 %v1687
        %1721 = vmatpush1.bf16.msra.mxu0 %v1686
        %1722 = vmatprep.subr.bf16.mxu0 %v1685
        %1723 = vmatpush1.bf16.msra.mxu0 %v1684
        %1724 = vmatprep.subr.bf16.mxu0 %v1683
        %1725 = vmatpush1.bf16.msra.mxu0 %v1682
        %1726 = vmatprep.subr.bf16.mxu0 %v1681
        %1727 = vmatpush1.bf16.msra.mxu0 %v1680
        %1728 = vmatprep.subr.bf16.mxu0 %v1679
        %1729 = vmatpush1.bf16.msra.mxu0 %v1678
        %1730 = vmatprep.subr.bf16.mxu0 %v1709
        %1731 = vmatpush2.bf16.msra.mxu0 %v1708
        %1732 = vmatprep.subr.bf16.mxu0 %v1707
        %1733 = vmatpush2.bf16.msra.mxu0 %v1706
        %1734 = vmatprep.subr.bf16.mxu0 %v1705
        %1735 = vmatpush2.bf16.msra.mxu0 %v1704
        %1736 = vmatprep.subr.bf16.mxu0 %v1703
        %1737 = vmatpush2.bf16.msra.mxu0 %v1702
        %1738 = vmatprep.subr.bf16.mxu0 %v1701
        %1739 = vmatpush2.bf16.msra.mxu0 %v1700
        %1740 = vmatprep.subr.bf16.mxu0 %v1699
        %1741 = vmatpush2.bf16.msra.mxu0 %v1698
        %1742 = vmatprep.subr.bf16.mxu0 %v1697
        %1743 = vmatpush2.bf16.msra.mxu0 %v1696
        %1744 = vmatprep.subr.bf16.mxu0 %v1695
        %1745 = vmatpush2.bf16.msra.mxu0 %v1694
        %1746 = vmatprep.mubr.bf16.mxu0 %v1713
        %1747 = vmatmul.mubr.bf16.gmra.mxu0 %v1712
        %v1748 = vpop.f32.mrf.mxu0
        %v1749 = vadd.f32 0.0, %v1748
        %v1750 = vpop.f32.mrf.mxu0
        %v1751 = vadd.f32 0.0, %v1750
        %v1752 = vpop.f32.mrf.mxu0
        %v1753 = vpop.f32.mrf.mxu0
        %1754 = vdwg.mxu0
        %v1755 = vrot.slane %v1047, 4
        %v1756 = vrot.slane %v1049, 4
        %v1759 = vsel %vm602, %v1749, %v1755
        %v1760 = vsel %vm602, %v1751, %v1756
        %1761 = vst [vmem:[%s453] sm:$0x3f] %v1759
        %1762 = vst [vmem:[%s453 + $0x8] sm:$0x3f] %v1760
        %p1763 = scmp.lt.s32.totalorder %s26, 1
        %s1764 = scalar_select %p1763, %s26, 1
        %s1765 = smul.addr %s1764, 2
        %s1766 = smul.addr %s1765, 8
        %s1767 = scalar_lea.vmem %s10, %s1766
        // Predicated region
        $region81: #{tpu_custom_call.1} parent=59 // pred_check
          %p1768 = pneg %p264
        $region82: #{tpu_custom_call.1} parent=59 // pred_check_branch
          %1770 = sbr.rel (%p1768) target = $region84
        $region83: #{tpu_custom_call.1} parent=59 // pred_region
          _
        $region84: #{tpu_custom_call.1} parent=59 // pred_fallthru
          _
      $region60: #{tpu_custom_call.1} parent=5 // pred_fallthru
        _
      %p1771 = scmp.le.s32.totalorder 2, %s21
      // Predicated region
      $region85: #{tpu_custom_call.1} parent=5 // pred_check
        %p1772 = pneg %p1771
      $region86: #{tpu_custom_call.1} parent=5 // pred_check_branch
        %1774 = sbr.rel (%p1772) target = $region88
      $region87: #{tpu_custom_call.1} parent=5 // pred_region
        %s1775 = ssub.s32 %s21, 2
        // Predicated region
        $region89: #{tpu_custom_call.1} parent=87 // pred_check
          %p1776 = pneg %p270
        $region90: #{tpu_custom_call.1} parent=87 // pred_check_branch
          %1778 = sbr.rel (%p1776) target = $region92
        $region91: #{tpu_custom_call.1} parent=87 // pred_region
          %p1779 = scmp.lt.s32.totalorder %s27, 1
          %s1780 = scalar_select %p1779, %s27, 1
          %s1781 = smul.addr %s1780, 2
          %s1782 = smul.addr %s1781, 8
          %s1783 = scalar_lea.vmem %s10, %s1782
        $region92: #{tpu_custom_call.1} parent=87 // pred_fallthru
          _
      $region88: #{tpu_custom_call.1} parent=5 // pred_fallthru
        _
    $region6: #{tpu_custom_call.1} parent=1 // loop_footer
      %s25 = sadd.s32 1, %s21
    $region7: #{tpu_custom_call.1} parent=1 // loop_footer_branch
      %20 = sbr.rel target = $region3
    $region8: #{tpu_custom_call.1} parent=1 // loop_exit
      _
    %1784 = vsyncpa [#allocation3], 1
    %s1785 = scalar_lea.sflag [#allocation3], 1
    %1786 = vsyncpa %s1785, 1
    %1787 = vsyncpa [#allocation5], 1
    %1788 = vsyncpa [#allocation8], 1

</llo_original>
